<compile_context>
chip_gen: v7x
topology: tpu7x:2x2x1
jax: 0.10.0
libtpu: 0.0.40
codegen_flags: <defaults>
</compile_context>

<pallas_src>
import functools

import numpy as np
import jax
import jax.numpy as jnp
from jax.experimental import pallas as pl
from jax.experimental.pallas import tpu as pltpu


def _round_up(x, m):
    return ((x + m - 1) // m) * m


def esan_batch_kernel(a_ref, x_ref, nid_ref,
                      w1_ref, b1_ref, w2_ref, b2_ref, w3_ref, b3_ref,
                      out_ref):
    """One grid step = gb subgraphs folded into a single block-diagonal problem.

    out_ref is the per-core partial accumulator (nodes_p, fout_p); its BlockSpec is
    constant along the sequential step axis so it stays VMEM-resident and is
    accumulated in place (no separate scratch buffer)."""
    step = pl.program_id(1)

    @pl.when(step == 0)
    def _init():
        out_ref[...] = jnp.zeros_like(out_ref)

    nodes_p = out_ref.shape[0]
    bf = jnp.bfloat16

    a = a_ref[...]                              # (gbn, gbn) block-diag A_hat, bf16
    x = x_ref[...]                              # (gbn, fin_p)                bf16
    gbn = a.shape[0]

    # ---- GCNConv 1: A_hat @ (X W1) + b1, ReLU --------------------------------
    h = jnp.dot(x, w1_ref[...], preferred_element_type=jnp.float32)
    h = jnp.dot(a, h.astype(bf), preferred_element_type=jnp.float32)
    h = jnp.maximum(h + b1_ref[...], 0.0)
    # TODO(synk): F.dropout(p=0.5) reproduced in eval mode (training=False -> identity).

    # ---- GCNConv 2: A_hat @ (h W2) + b2 ---------------------------------------
    h = jnp.dot(h.astype(bf), w2_ref[...], preferred_element_type=jnp.float32)
    h = jnp.dot(a, h.astype(bf), preferred_element_type=jnp.float32)
    h = h + b2_ref[...]

    # ---- shared_aggregator (nn.Linear); count column rides in the padded bias --
    y = jnp.dot(h.astype(bf), w3_ref[...], preferred_element_type=jnp.float32)
    y = y + b3_ref[...]                                            # (gbn, fout_p) f32

    # ---- scatter-add via on-chip one-hot; single bf16 MXU pass -----------------
    # TODO(synk): for very large num_nodes, tile the node dim as another grid axis
    # instead of keeping the full (nodes_p, fout_p) block resident.
    nid = nid_ref[...]                                             # (1, gbn) int32
    rows = jax.lax.broadcasted_iota(jnp.int32, (nodes_p, gbn), 0)
    s = (rows == nid).astype(bf)                                   # exact 0/1 in bf16
    out_ref[...] += jnp.dot(s, y.astype(bf), preferred_element_type=jnp.float32)


def esan_finalize_kernel(acc_ref, out_ref, *, fout):
    """Sum per-core partial slabs, divide by clamped counts, log_softmax."""
    acc = jnp.sum(acc_ref[...], axis=0)                            # (nodes_p, fout_p)
    lane = jax.lax.broadcasted_iota(jnp.int32, acc.shape, 1)
    cnt = jnp.maximum(
        jnp.sum(jnp.where(lane == fout, acc, 0.0), axis=1, keepdims=True),
        1.0)                                                       # clamp(min=1)
    preds = jnp.where(lane < fout, acc / cnt, -1e30)               # mask padded lanes
    m = jnp.max(preds, axis=1, keepdims=True)                      # log_softmax(dim=1)
    z = preds - m
    lse = jnp.log(jnp.sum(jnp.exp(z), axis=1, keepdims=True))
    out_ref[...] = z - lse


def esan_forward(a_stack, x_stack, n_id_stack, params, num_nodes, *, gb=16, ncores=2):
    G, N, _ = a_stack.shape
    assert G % gb == 0, "number of subgraphs must be divisible by the per-step batch"
    n_blocks = G // gb
    assert n_blocks % ncores == 0, "subgraph batches must split evenly across cores"
    steps = n_blocks // ncores
    gbn = gb * N

    fin = x_stack.shape[-1]
    hid = params["w1"].shape[1]
    fout = params["w3"].shape[1]

    # Minimal contraction padding (bf16 sublane multiple); lane-dense output only.
    fin_p = _round_up(fin, 16)
    hid_p = _round_up(hid, 16)
    fout_p = _round_up(fout + 1, 128)          # +1 column carries node counts
    nodes_p = _round_up(num_nodes, 8)

    bf = jnp.bfloat16

    # Block-diagonal A_hat per grid step: (n_blocks, gbn, gbn).
    a_blocks = a_stack.reshape(n_blocks, gb, N, N)
    eye = jnp.eye(gb, dtype=a_stack.dtype)
    a_bd = jnp.einsum('gh,bgij->bgihj', eye, a_blocks).reshape(
        n_blocks, gbn, gbn).astype(bf)

    x_p = jnp.zeros((G, N, fin_p), bf).at[:, :, :fin].set(x_stack.astype(bf))
    x_b = x_p.reshape(n_blocks, gbn, fin_p)

    w1 = jnp.zeros((fin_p, hid_p), bf).at[:fin, :hid].set(params["w1"].astype(bf))
    b1 = jnp.zeros((1, hid_p), jnp.float32).at[:, :hid].set(params["b1"])
    w2 = jnp.zeros((hid_p, hid_p), bf).at[:hid, :hid].set(params["w2"].astype(bf))
    b2 = jnp.zeros((1, hid_p), jnp.float32).at[:, :hid].set(params["b2"])
    w3 = jnp.zeros((hid_p, fout_p), bf).at[:hid, :fout].set(params["w3"].astype(bf))
    b3 = (jnp.zeros((1, fout_p), jnp.float32)
          .at[:, :fout].set(params["b3"])
          .at[0, fout].set(1.0))                                   # count column
    nid = n_id_stack.astype(jnp.int32).reshape(n_blocks, 1, gbn)   # lane-major n_id

    grid_spec = pltpu.PrefetchScalarGridSpec(
        num_scalar_prefetch=0,
        grid=(ncores, steps),
        in_specs=[
            pl.BlockSpec((None, gbn, gbn), lambda c, s: (c * steps + s, 0, 0)),
            pl.BlockSpec((None, gbn, fin_p), lambda c, s: (c * steps + s, 0, 0)),
            pl.BlockSpec((None, 1, gbn), lambda c, s: (c * steps + s, 0, 0)),
            # Constant-index blocks: fetched once, not re-DMA'd per step.
            pl.BlockSpec((fin_p, hid_p), lambda c, s: (0, 0)),     # W1
            pl.BlockSpec((1, hid_p), lambda c, s: (0, 0)),         # b1
            pl.BlockSpec((hid_p, hid_p), lambda c, s: (0, 0)),     # W2
            pl.BlockSpec((1, hid_p), lambda c, s: (0, 0)),         # b2
            pl.BlockSpec((hid_p, fout_p), lambda c, s: (0, 0)),    # W3
            pl.BlockSpec((1, fout_p), lambda c, s: (0, 0)),        # b3 (+count column)
        ],
        # Per-core partial accumulator slab, resident across the arbitrary step axis.
        out_specs=pl.BlockSpec((None, nodes_p, fout_p), lambda c, s: (c, 0, 0)),
    )

    partials = pl.pallas_call(
        esan_batch_kernel,
        out_shape=jax.ShapeDtypeStruct((ncores, nodes_p, fout_p), jnp.float32),
        grid_spec=grid_spec,
        compiler_params=pltpu.CompilerParams(
            # Core axis is parallel (v7x megacore); step axis carries the resident
            # accumulator so it must stay arbitrary.  VMEM footprint here is <1 MiB;
            # set vmem_limit_bytes explicitly if num_nodes / gb / hid grow (v7x 64 MiB).
            dimension_semantics=("parallel", "arbitrary")),
    )(a_bd, x_b, nid, w1, b1, w2, b2, w3, b3)

    out = pl.pallas_call(
        functools.partial(esan_finalize_kernel, fout=fout),
        out_shape=jax.ShapeDtypeStruct((nodes_p, fout_p), jnp.float32),
        grid=(1,),
        in_specs=[pl.BlockSpec((ncores, nodes_p, fout_p), lambda i: (0, 0, 0))],
        out_specs=pl.BlockSpec((nodes_p, fout_p), lambda i: (0, 0)),
    )(partials)
    return out[:num_nodes, :fout]


def reference_forward(a_stack, x_stack, n_id_stack, params, num_nodes):
    """Pure-JAX replica of ESAN.forward (eval mode), with the same bf16 MXU
    operands / f32 accumulation as the kernel so the comparison is tight."""
    bf = jnp.bfloat16
    fout = params["w3"].shape[1]
    b1, b2, b3 = params["b1"], params["b2"], params["b3"]
    w1 = params["w1"].astype(bf)
    w2 = params["w2"].astype(bf)
    w3 = params["w3"].astype(bf)

    def per_subgraph(a, x):
        a = a.astype(bf)
        x = x.astype(bf)
        h = jnp.dot(x, w1, preferred_element_type=jnp.float32)
        h = jnp.dot(a, h.astype(bf), preferred_element_type=jnp.float32) + b1
        h = jnp.maximum(h, 0.0)
        h = jnp.dot(h.astype(bf), w2, preferred_element_type=jnp.float32)
        h = jnp.dot(a, h.astype(bf), preferred_element_type=jnp.float32) + b2
        y = jnp.dot(h.astype(bf), w3, preferred_element_type=jnp.float32) + b3
        return y.astype(bf).astype(jnp.float32)     # kernel's bf16 scatter operand

    y_all = jax.vmap(per_subgraph)(a_stack, x_stack)            # (G, N, fout)
    idx = n_id_stack.reshape(-1)
    preds = jnp.zeros((num_nodes, fout), jnp.float32).at[idx].add(
        y_all.reshape(-1, fout))
    cnts = jnp.zeros((num_nodes,), jnp.float32).at[idx].add(1.0)
    preds = preds / jnp.clip(cnts, 1.0)[:, None]
    return jax.nn.log_softmax(preds, axis=1)


def build_normalized_adjacency(edges01):
    """edges01: (N, N) 0/1 dense adjacency (no self loops).  Returns GCN A_hat."""
    n = edges01.shape[0]
    a = edges01 + jnp.eye(n, dtype=jnp.float32)
    deg = jnp.sum(a, axis=1)
    d_inv_sqrt = 1.0 / jnp.sqrt(deg)
    return a * d_inv_sqrt[:, None] * d_inv_sqrt[None, :]


if __name__ == "__main__":
    # Small synthetic problem consistent with ESAN.forward.
    num_nodes = 32      # total nodes in the full graph
    G = 64              # number of subgraphs
    gb = 16             # per-grid-step batch  -> gb*N == 256 (v6e/v7x MXU width)
    ncores = 2          # leading "parallel" axis (v7x megacore; serial on v5e/v6e)
    N = 16              # nodes per subgraph
    input_dim = 8
    hidden_dim = 32
    output_dim = 8

    key = jax.random.PRNGKey(0)
    k_feat, k_w1, k_w2, k_w3, k_edges, k_perm = jax.random.split(key, 6)

    # Deterministic parameter init (GCNConv / Linear shapes from __init__).
    params = {
        "w1": 0.1 * jax.random.normal(k_w1, (input_dim, hidden_dim), jnp.float32),
        "b1": jnp.zeros((1, hidden_dim), jnp.float32),
        "w2": 0.1 * jax.random.normal(k_w2, (hidden_dim, hidden_dim), jnp.float32),
        "b2": jnp.zeros((1, hidden_dim), jnp.float32),
        "w3": 0.1 * jax.random.normal(k_w3, (hidden_dim, output_dim), jnp.float32),
        "b3": jnp.zeros((1, output_dim), jnp.float32),
    }

    # Global node features; each subgraph takes rows at its n_id.
    x_all = jax.random.normal(k_feat, (num_nodes, input_dim), jnp.float32)

    def make_subgraph(ek, pk):
        n_id = jax.random.permutation(pk, num_nodes)[:N]
        rnd = jax.random.uniform(ek, (N, N))
        e = (rnd < 0.3).astype(jnp.float32)
        e = jnp.clip(e + e.T, 0.0, 1.0) * (1.0 - jnp.eye(N, dtype=jnp.float32))
        return build_normalized_adjacency(e), x_all[n_id], n_id

    edge_keys = jax.random.split(k_edges, G)
    perm_keys = jax.random.split(k_perm, G)
    a_stack, x_stack, n_id_stack = jax.vmap(make_subgraph)(edge_keys, perm_keys)
    n_id_stack = n_id_stack.astype(jnp.int32)

    out = esan_forward(a_stack, x_stack, n_id_stack, params, num_nodes,
                       gb=gb, ncores=ncores)
    out = jax.block_until_ready(out)

    ref = reference_forward(a_stack, x_stack, n_id_stack, params, num_nodes)
    ref = jax.block_until_ready(ref)

    np.testing.assert_allclose(np.asarray(out), np.asarray(ref), atol=5e-4, rtol=5e-4)
    print("KERNEL_OK")
</pallas_src>

<mosaic_0001>
module attributes {stable_mosaic.version = 11 : i64} {
  func.func @esan_batch_kernel(%arg0: i32, %arg1: i32, %arg2: memref<1x256x256xbf16, #tpu.memory_space<vmem>>, %arg3: memref<1x256x16xbf16, #tpu.memory_space<vmem>>, %arg4: memref<1x1x256xi32, #tpu.memory_space<vmem>>, %arg5: memref<16x32xbf16, #tpu.memory_space<vmem>>, %arg6: memref<1x32xf32, #tpu.memory_space<vmem>>, %arg7: memref<32x32xbf16, #tpu.memory_space<vmem>>, %arg8: memref<1x32xf32, #tpu.memory_space<vmem>>, %arg9: memref<32x128xbf16, #tpu.memory_space<vmem>>, %arg10: memref<1x128xf32, #tpu.memory_space<vmem>>, %arg11: memref<1x32x128xf32, #tpu.memory_space<vmem>>) attributes {dimension_semantics = [#tpu.dimension_semantics<parallel>, #tpu.dimension_semantics<arbitrary>], iteration_bounds = array<i64: 2, 2>, scalar_prefetch = 0 : i64, scratch_operands = 0 : i64, tpu.core_type = #tpu.core_type<tc>, window_params = [{transform_indices = @transform_0, window_bounds = array<i64: 1, 256, 256>}, {transform_indices = @transform_1, window_bounds = array<i64: 1, 256, 16>}, {transform_indices = @transform_2, window_bounds = array<i64: 1, 1, 256>}, {pipeline_mode = #tpu.pipeline_mode<synchronous>, transform_indices = @transform_3, window_bounds = array<i64: 16, 32>}, {pipeline_mode = #tpu.pipeline_mode<synchronous>, transform_indices = @transform_4, window_bounds = array<i64: 1, 32>}, {pipeline_mode = #tpu.pipeline_mode<synchronous>, transform_indices = @transform_5, window_bounds = array<i64: 32, 32>}, {pipeline_mode = #tpu.pipeline_mode<synchronous>, transform_indices = @transform_6, window_bounds = array<i64: 1, 32>}, {pipeline_mode = #tpu.pipeline_mode<synchronous>, transform_indices = @transform_7, window_bounds = array<i64: 32, 128>}, {pipeline_mode = #tpu.pipeline_mode<synchronous>, transform_indices = @transform_8, window_bounds = array<i64: 1, 128>}, {transform_indices = @transform_9, window_bounds = array<i64: 1, 32, 128>}]} {
    %c0_i32 = arith.constant 0 : i32
    %0 = arith.cmpi eq, %arg1, %c0_i32 : i32
    %1 = arith.extui %0 : i1 to i32
    %c0_i32_0 = arith.constant 0 : i32
    %2 = arith.cmpi ne, %1, %c0_i32_0 : i32
    scf.if %2 {
      %cst_33 = arith.constant 0.000000e+00 : f32
      %46 = vector.broadcast %cst_33 : f32 to vector<32x128xf32>
      %c0_34 = arith.constant 0 : index
      %c0_35 = arith.constant 0 : index
      %c0_36 = arith.constant 0 : index
      %47 = vector.load %arg11[%c0_34, %c0_35, %c0_36] : memref<1x32x128xf32, #tpu.memory_space<vmem>>, vector<1x32x128xf32>
      %48 = vector.shape_cast %47 : vector<1x32x128xf32> to vector<32x128xf32>
      %49 = vector.shape_cast %46 : vector<32x128xf32> to vector<1x32x128xf32>
      tpu.vector_store %arg11[%c0_34, %c0_35, %c0_36], %49 {strides = array<i32>} : memref<1x32x128xf32, #tpu.memory_space<vmem>>, vector<1x32x128xf32>,
    } else {
    }
    %c0 = arith.constant 0 : index
    %c0_1 = arith.constant 0 : index
    %c0_2 = arith.constant 0 : index
    %3 = vector.load %arg2[%c0, %c0_1, %c0_2] : memref<1x256x256xbf16, #tpu.memory_space<vmem>>, vector<1x256x256xbf16>
    %4 = vector.shape_cast %3 : vector<1x256x256xbf16> to vector<256x256xbf16>
    %c0_3 = arith.constant 0 : index
    %c0_4 = arith.constant 0 : index
    %c0_5 = arith.constant 0 : index
    %5 = vector.load %arg3[%c0_3, %c0_4, %c0_5] : memref<1x256x16xbf16, #tpu.memory_space<vmem>>, vector<1x256x16xbf16>
    %6 = vector.shape_cast %5 : vector<1x256x16xbf16> to vector<256x16xbf16>
    %c0_6 = arith.constant 0 : index
    %c0_7 = arith.constant 0 : index
    %7 = vector.load %arg5[%c0_6, %c0_7] : memref<16x32xbf16, #tpu.memory_space<vmem>>, vector<16x32xbf16>
    %cst = arith.constant dense<0.000000e+00> : vector<256x32xf32>
    %8 = tpu.matmul %6, %7, %cst {dimension_numbers = #tpu.dot_dimension_numbers<[1], [0], [0], [1], [0, 0, 1, 1], [], []>} : vector<256x16xbf16>, vector<16x32xbf16>, vector<256x32xf32> -> vector<256x32xf32>
    %9 = arith.truncf %8 : vector<256x32xf32> to vector<256x32xbf16>
    %cst_8 = arith.constant dense<0.000000e+00> : vector<256x32xf32>
    %10 = tpu.matmul %4, %9, %cst_8 {dimension_numbers = #tpu.dot_dimension_numbers<[1], [0], [0], [1], [0, 0, 1, 1], [], []>} : vector<256x256xbf16>, vector<256x32xbf16>, vector<256x32xf32> -> vector<256x32xf32>
    %c0_9 = arith.constant 0 : index
    %c0_10 = arith.constant 0 : index
    %11 = vector.load %arg6[%c0_9, %c0_10] : memref<1x32xf32, #tpu.memory_space<vmem>>, vector<1x32xf32>
    %12 = vector.broadcast %11 : vector<1x32xf32> to vector<256x32xf32>
    %13 = arith.addf %10, %12 : vector<256x32xf32>
    %cst_11 = arith.constant 0.000000e+00 : f32
    %14 = vector.broadcast %cst_11 : f32 to vector<256x32xf32>
    %15 = arith.maximumf %13, %14 : vector<256x32xf32>
    %16 = arith.truncf %15 : vector<256x32xf32> to vector<256x32xbf16>
    %c0_12 = arith.constant 0 : index
    %c0_13 = arith.constant 0 : index
    %17 = vector.load %arg7[%c0_12, %c0_13] : memref<32x32xbf16, #tpu.memory_space<vmem>>, vector<32x32xbf16>
    %cst_14 = arith.constant dense<0.000000e+00> : vector<256x32xf32>
    %18 = tpu.matmul %16, %17, %cst_14 {dimension_numbers = #tpu.dot_dimension_numbers<[1], [0], [0], [1], [0, 0, 1, 1], [], []>} : vector<256x32xbf16>, vector<32x32xbf16>, vector<256x32xf32> -> vector<256x32xf32>
    %19 = arith.truncf %18 : vector<256x32xf32> to vector<256x32xbf16>
    %cst_15 = arith.constant dense<0.000000e+00> : vector<256x32xf32>
    %20 = tpu.matmul %4, %19, %cst_15 {dimension_numbers = #tpu.dot_dimension_numbers<[1], [0], [0], [1], [0, 0, 1, 1], [], []>} : vector<256x256xbf16>, vector<256x32xbf16>, vector<256x32xf32> -> vector<256x32xf32>
    %c0_16 = arith.constant 0 : index
    %c0_17 = arith.constant 0 : index
    %21 = vector.load %arg8[%c0_16, %c0_17] : memref<1x32xf32, #tpu.memory_space<vmem>>, vector<1x32xf32>
    %22 = vector.broadcast %21 : vector<1x32xf32> to vector<256x32xf32>
    %23 = arith.addf %20, %22 : vector<256x32xf32>
    %24 = arith.truncf %23 : vector<256x32xf32> to vector<256x32xbf16>
    %c0_18 = arith.constant 0 : index
    %c0_19 = arith.constant 0 : index
    %25 = vector.load %arg9[%c0_18, %c0_19] : memref<32x128xbf16, #tpu.memory_space<vmem>>, vector<32x128xbf16>
    %cst_20 = arith.constant dense<0.000000e+00> : vector<256x128xf32>
    %26 = tpu.matmul %24, %25, %cst_20 {dimension_numbers = #tpu.dot_dimension_numbers<[1], [0], [0], [1], [0, 0, 1, 1], [], []>} : vector<256x32xbf16>, vector<32x128xbf16>, vector<256x128xf32> -> vector<256x128xf32>
    %c0_21 = arith.constant 0 : index
    %c0_22 = arith.constant 0 : index
    %27 = vector.load %arg10[%c0_21, %c0_22] : memref<1x128xf32, #tpu.memory_space<vmem>>, vector<1x128xf32>
    %28 = vector.broadcast %27 : vector<1x128xf32> to vector<256x128xf32>
    %29 = arith.addf %26, %28 : vector<256x128xf32>
    %c0_23 = arith.constant 0 : index
    %c0_24 = arith.constant 0 : index
    %c0_25 = arith.constant 0 : index
    %30 = vector.load %arg4[%c0_23, %c0_24, %c0_25] : memref<1x1x256xi32, #tpu.memory_space<vmem>>, vector<1x1x256xi32>
    %31 = vector.shape_cast %30 : vector<1x1x256xi32> to vector<1x256xi32>
    %32 = tpu.iota {dimensions = array<i32: 0>} : vector<32x256xi32>
    %33 = vector.broadcast %31 : vector<1x256xi32> to vector<32x256xi32>
    %34 = arith.cmpi eq, %32, %33 : vector<32x256xi32>
    %35 = arith.extui %34 : vector<32x256xi1> to vector<32x256xi32>
    %36 = arith.sitofp %35 : vector<32x256xi32> to vector<32x256xf32>
    %37 = arith.truncf %36 : vector<32x256xf32> to vector<32x256xbf16>
    %c0_26 = arith.constant 0 : index
    %c0_27 = arith.constant 0 : index
    %c0_28 = arith.constant 0 : index
    %38 = vector.load %arg11[%c0_26, %c0_27, %c0_28] : memref<1x32x128xf32, #tpu.memory_space<vmem>>, vector<1x32x128xf32>
    %39 = vector.shape_cast %38 : vector<1x32x128xf32> to vector<32x128xf32>
    %40 = arith.truncf %29 : vector<256x128xf32> to vector<256x128xbf16>
    %cst_29 = arith.constant dense<0.000000e+00> : vector<32x128xf32>
    %41 = tpu.matmul %37, %40, %cst_29 {dimension_numbers = #tpu.dot_dimension_numbers<[1], [0], [0], [1], [0, 0, 1, 1], [], []>} : vector<32x256xbf16>, vector<256x128xbf16>, vector<32x128xf32> -> vector<32x128xf32>
    %42 = arith.addf %39, %41 : vector<32x128xf32>
    %c0_30 = arith.constant 0 : index
    %c0_31 = arith.constant 0 : index
    %c0_32 = arith.constant 0 : index
    %43 = vector.load %arg11[%c0_30, %c0_31, %c0_32] : memref<1x32x128xf32, #tpu.memory_space<vmem>>, vector<1x32x128xf32>
    %44 = vector.shape_cast %43 : vector<1x32x128xf32> to vector<32x128xf32>
    %45 = vector.shape_cast %42 : vector<32x128xf32> to vector<1x32x128xf32>
    tpu.vector_store %arg11[%c0_30, %c0_31, %c0_32], %45 {strides = array<i32>} : memref<1x32x128xf32, #tpu.memory_space<vmem>>, vector<1x32x128xf32>,
    return
  }
  func.func @transform_0(%arg0: i32, %arg1: i32) -> (i32, i32, i32) {
    %c2_i32 = arith.constant 2 : i32
    %0 = arith.muli %arg0, %c2_i32 : i32
    %1 = arith.addi %0, %arg1 : i32
    %c0_i32 = arith.constant 0 : i32
    %c0_i32_0 = arith.constant 0 : i32
    %c0_i32_1 = arith.constant 0 : i32
    return %1, %c0_i32, %c0_i32_0 : i32, i32, i32
  }
  func.func @transform_1(%arg0: i32, %arg1: i32) -> (i32, i32, i32) {
    %c2_i32 = arith.constant 2 : i32
    %0 = arith.muli %arg0, %c2_i32 : i32
    %1 = arith.addi %0, %arg1 : i32
    %c0_i32 = arith.constant 0 : i32
    %c0_i32_0 = arith.constant 0 : i32
    %c0_i32_1 = arith.constant 0 : i32
    return %1, %c0_i32, %c0_i32_0 : i32, i32, i32
  }
  func.func @transform_2(%arg0: i32, %arg1: i32) -> (i32, i32, i32) {
    %c2_i32 = arith.constant 2 : i32
    %0 = arith.muli %arg0, %c2_i32 : i32
    %1 = arith.addi %0, %arg1 : i32
    %c0_i32 = arith.constant 0 : i32
    %c0_i32_0 = arith.constant 0 : i32
    %c0_i32_1 = arith.constant 0 : i32
    return %1, %c0_i32, %c0_i32_0 : i32, i32, i32
  }
  func.func @transform_3(%arg0: i32, %arg1: i32) -> (i32, i32) {
    %c0_i32 = arith.constant 0 : i32
    %c0_i32_0 = arith.constant 0 : i32
    %c0_i32_1 = arith.constant 0 : i32
    return %c0_i32, %c0_i32_0 : i32, i32
  }
  func.func @transform_4(%arg0: i32, %arg1: i32) -> (i32, i32) {
    %c0_i32 = arith.constant 0 : i32
    %c0_i32_0 = arith.constant 0 : i32
    %c0_i32_1 = arith.constant 0 : i32
    return %c0_i32, %c0_i32_0 : i32, i32
  }
  func.func @transform_5(%arg0: i32, %arg1: i32) -> (i32, i32) {
    %c0_i32 = arith.constant 0 : i32
    %c0_i32_0 = arith.constant 0 : i32
    %c0_i32_1 = arith.constant 0 : i32
    return %c0_i32, %c0_i32_0 : i32, i32
  }
  func.func @transform_6(%arg0: i32, %arg1: i32) -> (i32, i32) {
    %c0_i32 = arith.constant 0 : i32
    %c0_i32_0 = arith.constant 0 : i32
    %c0_i32_1 = arith.constant 0 : i32
    return %c0_i32, %c0_i32_0 : i32, i32
  }
  func.func @transform_7(%arg0: i32, %arg1: i32) -> (i32, i32) {
    %c0_i32 = arith.constant 0 : i32
    %c0_i32_0 = arith.constant 0 : i32
    %c0_i32_1 = arith.constant 0 : i32
    return %c0_i32, %c0_i32_0 : i32, i32
  }
  func.func @transform_8(%arg0: i32, %arg1: i32) -> (i32, i32) {
    %c0_i32 = arith.constant 0 : i32
    %c0_i32_0 = arith.constant 0 : i32
    %c0_i32_1 = arith.constant 0 : i32
    return %c0_i32, %c0_i32_0 : i32, i32
  }
  func.func @transform_9(%arg0: i32, %arg1: i32) -> (i32, i32, i32) {
    %c0_i32 = arith.constant 0 : i32
    %c0_i32_0 = arith.constant 0 : i32
    %c0_i32_1 = arith.constant 0 : i32
    return %arg0, %c0_i32, %c0_i32_0 : i32, i32, i32
  }
}

</mosaic_0001>

<llo_original>
// kernel: tpu_custom_call.1
$region0: #{tpu_custom_call.1}
  #allocation0 [shape = 'u32[]', space=smem, size = 0x4, offset = 0x4, fixed_abs, tag = 'smem constant byte address 0x4 - core index']
  #allocation1 [shape = 'u32[144,128]{1,0:T(1,128)}', space=vmem, size = 0x12000, scoped, tag = 'internal scratch']
  %s0 = inlined_call_operand.hbm [shape: bf16[4,256,256], index: 0, kind: input, shape index: {}]
  %s1 = inlined_call_operand.vmem [shape: bf16[4,256,16], index: 1, kind: input, shape index: {}]
  %s2 = inlined_call_operand.vmem [shape: s32[4,1,256], index: 2, kind: input, shape index: {}]
  %s3 = inlined_call_operand.vmem [shape: bf16[16,32], index: 3, kind: input, shape index: {}]
  %s4 = inlined_call_operand.vmem [shape: f32[1,32], index: 4, kind: input, shape index: {}]
  %s5 = inlined_call_operand.vmem [shape: bf16[32,32], index: 5, kind: input, shape index: {}]
  %s6 = inlined_call_operand.vmem [shape: f32[1,32], index: 6, kind: input, shape index: {}]
  %s7 = inlined_call_operand.vmem [shape: bf16[32,128], index: 7, kind: input, shape index: {}]
  %s8 = inlined_call_operand.vmem [shape: f32[1,128], index: 8, kind: input, shape index: {}]
  %s9 = inlined_call_operand.hbm [shape: f32[2,32,128], index: 9, kind: output, shape index: {}]
  %s10 = sld [smem:[#allocation0]]
  $region77: #{tpu_custom_call.1} parent=0
    _
  %s12 = ssub.s32 1, %s10
  %s13 = scalar_select 0, %s12, %s10
  $region1: #{tpu_custom_call.1} parent=0
    #allocation2 [shape = 'u8[262144]{0}', space=vmem, size = 0x40000, scoped, tag = 'input window, operand 0']
    #allocation3 [shape = 's32[2]{0}', space=sflag, size = 0x8, scoped, tag = 'scoped memory for tpu_custom_call.1']
    #allocation4 [shape = 's32[2]{0}', space=sflag, size = 0x8, scoped, tag = 'scoped memory for tpu_custom_call.1']
    #allocation5 [shape = 'u8[32768]{0}', space=vmem, size = 0x8000, scoped, tag = 'output window, operand 0']
    %14 = vsyncpa [#allocation3], 0
    %s15 = scalar_lea.sflag [#allocation3], 1
    %16 = vsyncpa %s15, 0
    %17 = vsyncpa [#allocation4], 0
    %s18 = scalar_lea.sflag [#allocation4], 1
    %19 = vsyncpa %s18, 0
    loop: start=0, step=1, limit=6
    $region2: #{tpu_custom_call.1} parent=1 // loop_pre_header
      _
    $region3: #{tpu_custom_call.1} parent=1 // loop_header
      %s21 = sphi 0, %s25
      %p22 = scmp.ge.s32.totalorder %s21, 6
      %s28 = sphi 0, %s40
      %s29 = sphi 0, %s36
      %s30 = sphi 0, %s28
      %s31 = sphi 0, %s29
      %s32 = sphi 0, %s30
      %s33 = sphi 0, %s31
      %s47 = sphi 0, %s49
      %s50 = sphi 0, %s47
      %s51 = sphi 0, %s50
      %s67 = sphi 0, %s51
      %s77 = sphi 0, %s79
      %s80 = sphi 0, %s77
      %s81 = sphi 0, %s80
      %s97 = sphi 0, %s81
      %s107 = sphi 0, %s109
      %s110 = sphi 0, %s107
      %s111 = sphi 0, %s110
      %s127 = sphi 0, %s111
      %s131 = sphi 0, %s131
      %s133 = sphi 0, %s131
      %s134 = sphi 0, %s133
      %s148 = sphi 0, %s134
      %s152 = sphi 0, %s152
      %s154 = sphi 0, %s152
      %s155 = sphi 0, %s154
      %s169 = sphi 0, %s155
      %s173 = sphi 0, %s173
      %s175 = sphi 0, %s173
      %s176 = sphi 0, %s175
      %s190 = sphi 0, %s176
      %s194 = sphi 0, %s194
      %s196 = sphi 0, %s194
      %s197 = sphi 0, %s196
      %s211 = sphi 0, %s197
      %s215 = sphi 0, %s215
      %s217 = sphi 0, %s215
      %s218 = sphi 0, %s217
      %s232 = sphi 0, %s218
      %s236 = sphi 0, %s236
      %s238 = sphi 0, %s236
      %s239 = sphi 0, %s238
      %s253 = sphi 0, %s239
      %s259 = sphi 0, %s261
      %s262 = sphi 0, %s259
      %s263 = sphi 0, %s262
      %s279 = sphi 0, %s263
    $region4: #{tpu_custom_call.1} parent=1 // loop_header_branch
      %24 = sbr.rel (%p22) target = $region8
    $region5: #{tpu_custom_call.1} parent=1 // loop_body
      %s26 = ssub.s32 %s21, 1
      %s27 = ssub.s32 %s21, 2
      %s34 = sadd.s32 1, %s29
      %p35 = scmp.ge.s32.totalorder %s34, 2
      %s36 = scalar_select %p35, 0, %s34
      %s37 = sadd.s32 1, %s28
      %s38 = scalar_select %p35, %s37, %s28
      %p39 = scmp.ge.s32.totalorder %s38, 2
      %s40 = scalar_select %p39, 0, %s38
      %s41 = smul.u32 %s28, 2
      %s42 = sadd.s32 %s41, %s29
      %s43 = smul.u32 %s40, 2
      %s44 = sadd.s32 %s43, %s36
      %s45 = ssub.s32 %s42, %s44
      %p46 = scmp.eq.s32.totalorder %s45, 0
      %s48 = sadd.s32 %s47, 1
      %s49 = scalar_select %p46, %s47, %s48
      %p52 = pneg %p46
      %p53 = scmp.eq.s32.totalorder %s21, 3
      %p54 = por %p52, %p53
      %p55 = scmp.ne.s32.totalorder %s47, %s50
      %p56 = scmp.eq.s32.totalorder %s21, 0
      %p57 = por %p55, %p56
      %p58 = scmp.ne.s32.totalorder %s47, %s50
      %p59 = scmp.eq.s32.totalorder %s26, 3
      %p60 = por %p58, %p59
      %p61 = scmp.ne.s32.totalorder %s50, %s51
      %p62 = scmp.eq.s32.totalorder %s26, 0
      %p63 = por %p61, %p62
      %p64 = scmp.ne.s32.totalorder %s50, %s51
      %p65 = scmp.eq.s32.totalorder %s27, 3
      %p66 = por %p64, %p65
      %p68 = scmp.ne.s32.totalorder %s51, %s67
      %p69 = scmp.eq.s32.totalorder %s27, 0
      %p70 = por %p68, %p69
      %s71 = smul.u32 %s28, 2
      %s72 = sadd.s32 %s71, %s29
      %s73 = smul.u32 %s40, 2
      %s74 = sadd.s32 %s73, %s36
      %s75 = ssub.s32 %s72, %s74
      %p76 = scmp.eq.s32.totalorder %s75, 0
      %s78 = sadd.s32 %s77, 1
      %s79 = scalar_select %p76, %s77, %s78
      %p82 = pneg %p76
      %p83 = scmp.eq.s32.totalorder %s21, 3
      %p84 = por %p82, %p83
      %p85 = scmp.ne.s32.totalorder %s77, %s80
      %p86 = scmp.eq.s32.totalorder %s21, 0
      %p87 = por %p85, %p86
      %p88 = scmp.ne.s32.totalorder %s77, %s80
      %p89 = scmp.eq.s32.totalorder %s26, 3
      %p90 = por %p88, %p89
      %p91 = scmp.ne.s32.totalorder %s80, %s81
      %p92 = scmp.eq.s32.totalorder %s26, 0
      %p93 = por %p91, %p92
      %p94 = scmp.ne.s32.totalorder %s80, %s81
      %p95 = scmp.eq.s32.totalorder %s27, 3
      %p96 = por %p94, %p95
      %p98 = scmp.ne.s32.totalorder %s81, %s97
      %p99 = scmp.eq.s32.totalorder %s27, 0
      %p100 = por %p98, %p99
      %s101 = smul.u32 %s28, 2
      %s102 = sadd.s32 %s101, %s29
      %s103 = smul.u32 %s40, 2
      %s104 = sadd.s32 %s103, %s36
      %s105 = ssub.s32 %s102, %s104
      %p106 = scmp.eq.s32.totalorder %s105, 0
      %s108 = sadd.s32 %s107, 1
      %s109 = scalar_select %p106, %s107, %s108
      %p112 = pneg %p106
      %p113 = scmp.eq.s32.totalorder %s21, 3
      %p114 = por %p112, %p113
      %p115 = scmp.ne.s32.totalorder %s107, %s110
      %p116 = scmp.eq.s32.totalorder %s21, 0
      %p117 = por %p115, %p116
      %p118 = scmp.ne.s32.totalorder %s107, %s110
      %p119 = scmp.eq.s32.totalorder %s26, 3
      %p120 = por %p118, %p119
      %p121 = scmp.ne.s32.totalorder %s110, %s111
      %p122 = scmp.eq.s32.totalorder %s26, 0
      %p123 = por %p121, %p122
      %p124 = scmp.ne.s32.totalorder %s110, %s111
      %p125 = scmp.eq.s32.totalorder %s27, 3
      %p126 = por %p124, %p125
      %p128 = scmp.ne.s32.totalorder %s111, %s127
      %p129 = scmp.eq.s32.totalorder %s27, 0
      %p130 = por %p128, %p129
      %s132 = sadd.s32 %s131, 1
      %p135 = scmp.eq.s32.totalorder %s21, 3
      %p136 = scmp.ne.s32.totalorder %s131, %s133
      %p137 = scmp.eq.s32.totalorder %s21, 0
      %p138 = por %p136, %p137
      %p139 = scmp.ne.s32.totalorder %s131, %s133
      %p140 = scmp.eq.s32.totalorder %s26, 3
      %p141 = por %p139, %p140
      %p142 = scmp.ne.s32.totalorder %s133, %s134
      %p143 = scmp.eq.s32.totalorder %s26, 0
      %p144 = por %p142, %p143
      %p145 = scmp.ne.s32.totalorder %s133, %s134
      %p146 = scmp.eq.s32.totalorder %s27, 3
      %p147 = por %p145, %p146
      %p149 = scmp.ne.s32.totalorder %s134, %s148
      %p150 = scmp.eq.s32.totalorder %s27, 0
      %p151 = por %p149, %p150
      %s153 = sadd.s32 %s152, 1
      %p156 = scmp.eq.s32.totalorder %s21, 3
      %p157 = scmp.ne.s32.totalorder %s152, %s154
      %p158 = scmp.eq.s32.totalorder %s21, 0
      %p159 = por %p157, %p158
      %p160 = scmp.ne.s32.totalorder %s152, %s154
      %p161 = scmp.eq.s32.totalorder %s26, 3
      %p162 = por %p160, %p161
      %p163 = scmp.ne.s32.totalorder %s154, %s155
      %p164 = scmp.eq.s32.totalorder %s26, 0
      %p165 = por %p163, %p164
      %p166 = scmp.ne.s32.totalorder %s154, %s155
      %p167 = scmp.eq.s32.totalorder %s27, 3
      %p168 = por %p166, %p167
      %p170 = scmp.ne.s32.totalorder %s155, %s169
      %p171 = scmp.eq.s32.totalorder %s27, 0
      %p172 = por %p170, %p171
      %s174 = sadd.s32 %s173, 1
      %p177 = scmp.eq.s32.totalorder %s21, 3
      %p178 = scmp.ne.s32.totalorder %s173, %s175
      %p179 = scmp.eq.s32.totalorder %s21, 0
      %p180 = por %p178, %p179
      %p181 = scmp.ne.s32.totalorder %s173, %s175
      %p182 = scmp.eq.s32.totalorder %s26, 3
      %p183 = por %p181, %p182
      %p184 = scmp.ne.s32.totalorder %s175, %s176
      %p185 = scmp.eq.s32.totalorder %s26, 0
      %p186 = por %p184, %p185
      %p187 = scmp.ne.s32.totalorder %s175, %s176
      %p188 = scmp.eq.s32.totalorder %s27, 3
      %p189 = por %p187, %p188
      %p191 = scmp.ne.s32.totalorder %s176, %s190
      %p192 = scmp.eq.s32.totalorder %s27, 0
      %p193 = por %p191, %p192
      %s195 = sadd.s32 %s194, 1
      %p198 = scmp.eq.s32.totalorder %s21, 3
      %p199 = scmp.ne.s32.totalorder %s194, %s196
      %p200 = scmp.eq.s32.totalorder %s21, 0
      %p201 = por %p199, %p200
      %p202 = scmp.ne.s32.totalorder %s194, %s196
      %p203 = scmp.eq.s32.totalorder %s26, 3
      %p204 = por %p202, %p203
      %p205 = scmp.ne.s32.totalorder %s196, %s197
      %p206 = scmp.eq.s32.totalorder %s26, 0
      %p207 = por %p205, %p206
      %p208 = scmp.ne.s32.totalorder %s196, %s197
      %p209 = scmp.eq.s32.totalorder %s27, 3
      %p210 = por %p208, %p209
      %p212 = scmp.ne.s32.totalorder %s197, %s211
      %p213 = scmp.eq.s32.totalorder %s27, 0
      %p214 = por %p212, %p213
      %s216 = sadd.s32 %s215, 1
      %p219 = scmp.eq.s32.totalorder %s21, 3
      %p220 = scmp.ne.s32.totalorder %s215, %s217
      %p221 = scmp.eq.s32.totalorder %s21, 0
      %p222 = por %p220, %p221
      %p223 = scmp.ne.s32.totalorder %s215, %s217
      %p224 = scmp.eq.s32.totalorder %s26, 3
      %p225 = por %p223, %p224
      %p226 = scmp.ne.s32.totalorder %s217, %s218
      %p227 = scmp.eq.s32.totalorder %s26, 0
      %p228 = por %p226, %p227
      %p229 = scmp.ne.s32.totalorder %s217, %s218
      %p230 = scmp.eq.s32.totalorder %s27, 3
      %p231 = por %p229, %p230
      %p233 = scmp.ne.s32.totalorder %s218, %s232
      %p234 = scmp.eq.s32.totalorder %s27, 0
      %p235 = por %p233, %p234
      %s237 = sadd.s32 %s236, 1
      %p240 = scmp.eq.s32.totalorder %s21, 3
      %p241 = scmp.ne.s32.totalorder %s236, %s238
      %p242 = scmp.eq.s32.totalorder %s21, 0
      %p243 = por %p241, %p242
      %p244 = scmp.ne.s32.totalorder %s236, %s238
      %p245 = scmp.eq.s32.totalorder %s26, 3
      %p246 = por %p244, %p245
      %p247 = scmp.ne.s32.totalorder %s238, %s239
      %p248 = scmp.eq.s32.totalorder %s26, 0
      %p249 = por %p247, %p248
      %p250 = scmp.ne.s32.totalorder %s238, %s239
      %p251 = scmp.eq.s32.totalorder %s27, 3
      %p252 = por %p250, %p251
      %p254 = scmp.ne.s32.totalorder %s239, %s253
      %p255 = scmp.eq.s32.totalorder %s27, 0
      %p256 = por %p254, %p255
      %s257 = ssub.s32 %s28, %s40
      %p258 = scmp.eq.s32.totalorder %s257, 0
      %s260 = sadd.s32 %s259, 1
      %s261 = scalar_select %p258, %s259, %s260
      %p264 = pneg %p258
      %p265 = scmp.eq.s32.totalorder %s21, 3
      %p266 = por %p264, %p265
      %p267 = scmp.ne.s32.totalorder %s259, %s262
      %p268 = scmp.eq.s32.totalorder %s21, 0
      %p269 = por %p267, %p268
      %p270 = scmp.ne.s32.totalorder %s259, %s262
      %p271 = scmp.eq.s32.totalorder %s26, 3
      %p272 = por %p270, %p271
      %p273 = scmp.ne.s32.totalorder %s262, %s263
      %p274 = scmp.eq.s32.totalorder %s26, 0
      %p275 = por %p273, %p274
      %p276 = scmp.ne.s32.totalorder %s262, %s263
      %p277 = scmp.eq.s32.totalorder %s27, 3
      %p278 = por %p276, %p277
      %p280 = scmp.ne.s32.totalorder %s263, %s279
      %p281 = scmp.eq.s32.totalorder %s27, 0
      %p282 = por %p280, %p281
      %p283 = scmp.le.s32.totalorder 1, %s21
      %p284 = scmp.lt.s32.totalorder %s21, 5
      %p285 = pnand %p283, %p284
      %p286 = pneg %p285
      // Predicated region
      $region9: #{tpu_custom_call.1} parent=5 // pred_check
        _
      $region10: #{tpu_custom_call.1} parent=5 // pred_check_branch
        %288 = sbr.rel (%p285) target = $region12
      $region11: #{tpu_custom_call.1} parent=5 // pred_region
        %s289 = ssub.s32 %s21, 1
        // Predicated region
        $region13: #{tpu_custom_call.1} parent=11 // pred_check
          %p290 = pneg %p144
        $region14: #{tpu_custom_call.1} parent=11 // pred_check_branch
          %292 = sbr.rel (%p290) target = $region16
        $region15: #{tpu_custom_call.1} parent=11 // pred_region
          _
        $region16: #{tpu_custom_call.1} parent=11 // pred_fallthru
          _
        // Predicated region
        $region17: #{tpu_custom_call.1} parent=11 // pred_check
          %p293 = pneg %p165
        $region18: #{tpu_custom_call.1} parent=11 // pred_check_branch
          %295 = sbr.rel (%p293) target = $region20
        $region19: #{tpu_custom_call.1} parent=11 // pred_region
          _
        $region20: #{tpu_custom_call.1} parent=11 // pred_fallthru
          _
        // Predicated region
        $region21: #{tpu_custom_call.1} parent=11 // pred_check
          %p296 = pneg %p186
        $region22: #{tpu_custom_call.1} parent=11 // pred_check_branch
          %298 = sbr.rel (%p296) target = $region24
        $region23: #{tpu_custom_call.1} parent=11 // pred_region
          _
        $region24: #{tpu_custom_call.1} parent=11 // pred_fallthru
          _
        // Predicated region
        $region25: #{tpu_custom_call.1} parent=11 // pred_check
          %p299 = pneg %p207
        $region26: #{tpu_custom_call.1} parent=11 // pred_check_branch
          %301 = sbr.rel (%p299) target = $region28
        $region27: #{tpu_custom_call.1} parent=11 // pred_region
          _
        $region28: #{tpu_custom_call.1} parent=11 // pred_fallthru
          _
        // Predicated region
        $region29: #{tpu_custom_call.1} parent=11 // pred_check
          %p302 = pneg %p228
        $region30: #{tpu_custom_call.1} parent=11 // pred_check_branch
          %304 = sbr.rel (%p302) target = $region32
        $region31: #{tpu_custom_call.1} parent=11 // pred_region
          _
        $region32: #{tpu_custom_call.1} parent=11 // pred_fallthru
          _
        // Predicated region
        $region33: #{tpu_custom_call.1} parent=11 // pred_check
          %p305 = pneg %p249
        $region34: #{tpu_custom_call.1} parent=11 // pred_check_branch
          %307 = sbr.rel (%p305) target = $region36
        $region35: #{tpu_custom_call.1} parent=11 // pred_region
          _
        $region36: #{tpu_custom_call.1} parent=11 // pred_fallthru
          _
      $region12: #{tpu_custom_call.1} parent=5 // pred_fallthru
        _
      %p308 = scmp.lt.s32.totalorder %s21, 4
      // Predicated region
      $region37: #{tpu_custom_call.1} parent=5 // pred_check
        %p309 = pneg %p308
      $region38: #{tpu_custom_call.1} parent=5 // pred_check_branch
        %311 = sbr.rel (%p309) target = $region40
      $region39: #{tpu_custom_call.1} parent=5 // pred_region
        // Predicated region
        $region41: #{tpu_custom_call.1} parent=39 // pred_check
          %p312 = pneg %p57
        $region42: #{tpu_custom_call.1} parent=39 // pred_check_branch
          %314 = sbr.rel (%p312) target = $region44
        $region43: #{tpu_custom_call.1} parent=39 // pred_region
          %s315 = sand.u32 %s47, 1
          %s316 = scalar_lea.sflag [#allocation3], %s315
          %s317 = sand.u32 %s47, 1
          %s318 = smul.addr %s317, 256
          %s319 = scalar_lea.vmem [#allocation2], %s318
          %s320 = smul.u32 %s28, 2
          %s321 = sadd.s32 %s320, %s29
          %s323 = ssub.s32 4096, 4096
          %324 = vsyncadd %s316, %s323
          %s325 = smul.addr %s321, 64
          %s326 = smul.addr %s325, 64
          %s327 = scalar_lea.hbm %s0, %s326
          %s328 = sshll.u32 %s319, 4
          %s329 = int_to_ptr.vmem [resolvable:$true] %s328
          %334 = dma.hbm_to_vmem [thread:$0]  %s327, 4096, %s329, %s316, 128, 128, 8
        $region44: #{tpu_custom_call.1} parent=39 // pred_fallthru
          _
        // Predicated region
        $region45: #{tpu_custom_call.1} parent=39 // pred_check
          %p335 = pneg %p87
        $region46: #{tpu_custom_call.1} parent=39 // pred_check_branch
          %337 = sbr.rel (%p335) target = $region48
        $region47: #{tpu_custom_call.1} parent=39 // pred_region
          %s338 = smul.u32 %s28, 2
          %s339 = sadd.s32 %s338, %s29
          %p340 = scmp.lt.s32.totalorder %s339, 3
          %s341 = scalar_select %p340, %s339, 3
          %s342 = smul.addr %s341, 32
          %s343 = smul.addr %s342, 4
          %s344 = scalar_lea.vmem %s1, %s343
          %s345 = smul.u32 %s28, 2
          %s346 = sadd.s32 %s345, %s29
        $region48: #{tpu_custom_call.1} parent=39 // pred_fallthru
          _
        // Predicated region
        $region49: #{tpu_custom_call.1} parent=39 // pred_check
          %p347 = pneg %p117
        $region50: #{tpu_custom_call.1} parent=39 // pred_check_branch
          %349 = sbr.rel (%p347) target = $region52
        $region51: #{tpu_custom_call.1} parent=39 // pred_region
          %s350 = smul.u32 %s28, 2
          %s351 = sadd.s32 %s350, %s29
          %p352 = scmp.lt.s32.totalorder %s351, 3
          %s353 = scalar_select %p352, %s351, 3
          %s354 = smul.addr %s353, 2
          %s355 = scalar_lea.vmem %s2, %s354
          %s356 = smul.u32 %s28, 2
          %s357 = sadd.s32 %s356, %s29
        $region52: #{tpu_custom_call.1} parent=39 // pred_fallthru
          _
      $region40: #{tpu_custom_call.1} parent=5 // pred_fallthru
        _
      %p358 = scmp.le.s32.totalorder 1, %s21
      %p359 = scmp.lt.s32.totalorder %s21, 5
      %p360 = pnand %p358, %p359
      %p361 = pneg %p360
      // Predicated region
      $region53: #{tpu_custom_call.1} parent=5 // pred_check
        _
      $region54: #{tpu_custom_call.1} parent=5 // pred_check_branch
        %363 = sbr.rel (%p360) target = $region56
      $region55: #{tpu_custom_call.1} parent=5 // pred_region
        %s364 = ssub.s32 %s21, 1
        %s365 = sand.u32 %s50, 1
        %s366 = scalar_lea.sflag [#allocation3], %s365
        %s367 = sand.u32 %s50, 1
        %s368 = smul.addr %s367, 256
        %s369 = scalar_lea.vmem [#allocation2], %s368
        // Predicated region
        $region57: #{tpu_custom_call.1} parent=55 // pred_check
          %p370 = pneg %p63
        $region58: #{tpu_custom_call.1} parent=55 // pred_check_branch
          %372 = sbr.rel (%p370) target = $region60
        $region59: #{tpu_custom_call.1} parent=55 // pred_region
          %373 = dma.done %s366, 4096
        $region60: #{tpu_custom_call.1} parent=55 // pred_fallthru
          _
        %s374 = sand.u32 %s50, 1
        %s375 = scalar_lea.sflag [#allocation3], %s374
        %s376 = sand.u32 %s50, 1
        %s377 = smul.addr %s376, 256
        %s378 = scalar_lea.vmem [#allocation2], %s377
        %p379 = pneg %p63
        %p380 = pneg %p60
        %s381 = smul.u32 %s30, 2
        %s382 = sadd.s32 %s381, %s31
        %p383 = scmp.lt.s32.totalorder %s382, 3
        %s384 = scalar_select %p383, %s382, 3
        %s385 = smul.addr %s384, 32
        %s386 = smul.addr %s385, 4
        %s387 = scalar_lea.vmem %s1, %s386
        %p388 = pneg %p93
        %p389 = pneg %p90
        %s390 = smul.u32 %s30, 2
        %s391 = sadd.s32 %s390, %s31
        %p392 = scmp.lt.s32.totalorder %s391, 3
        %s393 = scalar_select %p392, %s391, 3
        %s394 = smul.addr %s393, 2
        %s395 = scalar_lea.vmem %s2, %s394
        %p396 = pneg %p123
        %p397 = pneg %p120
        %p398 = pneg %p144
        %p399 = pneg %p141
        %p400 = pneg %p165
        %p401 = pneg %p162
        %p402 = pneg %p186
        %p403 = pneg %p183
        %p404 = pneg %p207
        %p405 = pneg %p204
        %p406 = pneg %p228
        %p407 = pneg %p225
        %p408 = pneg %p249
        %p409 = pneg %p246
        %p410 = pneg %p275
        %p411 = pneg %p272
        %s412 = sand.u32 %s262, 1
        %s413 = scalar_lea.sflag [#allocation4], %s412
        %s414 = sand.u32 %s262, 1
        %s415 = smul.addr %s414, 32
        %s416 = scalar_lea.vmem [#allocation5], %s415
        %s417 = smul.u32 %s30, 2
        %s418 = sadd.s32 %s417, %s31
        %s419 = smul.u32 %s30, 2
        %s420 = sadd.s32 %s419, %s31
        %p421 = scmp.lt.s32.totalorder %s420, 3
        %s422 = scalar_select %p421, %s420, 3
        %s423 = smul.addr %s422, 32
        %s424 = smul.addr %s423, 4
        %s425 = scalar_lea.vmem %s1, %s424
        %s426 = smul.u32 %s30, 2
        %s427 = sadd.s32 %s426, %s31
        %s428 = smul.u32 %s30, 2
        %s429 = sadd.s32 %s428, %s31
        %p430 = scmp.lt.s32.totalorder %s429, 3
        %s431 = scalar_select %p430, %s429, 3
        %s432 = smul.addr %s431, 2
        %s433 = scalar_lea.vmem %s2, %s432
        %s434 = smul.u32 %s30, 2
        %s435 = sadd.s32 %s434, %s31
        %p437 = scmp.eq.s32.totalorder %s31, 0
        // Predicated region
        $region61: #{tpu_custom_call.1} parent=55 // pred_check
          %p438 = pneg %p437
        $region62: #{tpu_custom_call.1} parent=55 // pred_check_branch
          %440 = sbr.rel (%p438) target = $region64
        $region63: #{tpu_custom_call.1} parent=55 // pred_region
          %441 = vst [vmem:[%s416] sm:$0xff] 0.0
          %442 = vst [vmem:[%s416 + $0x8] sm:$0xff] 0.0
          %443 = vst [vmem:[%s416 + $0x10] sm:$0xff] 0.0
          %444 = vst [vmem:[%s416 + $0x18] sm:$0xff] 0.0
        $region64: #{tpu_custom_call.1} parent=55 // pred_fallthru
          _
        %v445 = vld [vmem:[%s369] sm:$0xff]
        %v446 = vld [vmem:[%s369 + $0x8] sm:$0xff]
        %v447 = vld [vmem:[%s369 + $0x10] sm:$0xff]
        %v448 = vld [vmem:[%s369 + $0x18] sm:$0xff]
        %v449 = vld [vmem:[%s369 + $0x20] sm:$0xff]
        %v450 = vld [vmem:[%s369 + $0x28] sm:$0xff]
        %v451 = vld [vmem:[%s369 + $0x30] sm:$0xff]
        %v452 = vld [vmem:[%s369 + $0x38] sm:$0xff]
        %v453 = vld [vmem:[%s369 + $0x40] sm:$0xff]
        %v454 = vld [vmem:[%s369 + $0x48] sm:$0xff]
        %v455 = vld [vmem:[%s369 + $0x50] sm:$0xff]
        %v456 = vld [vmem:[%s369 + $0x58] sm:$0xff]
        %v457 = vld [vmem:[%s369 + $0x60] sm:$0xff]
        %v458 = vld [vmem:[%s369 + $0x68] sm:$0xff]
        %v459 = vld [vmem:[%s369 + $0x70] sm:$0xff]
        %v460 = vld [vmem:[%s369 + $0x78] sm:$0xff]
        %v461 = vld [vmem:[%s369 + $0x80] sm:$0xff]
        %v462 = vld [vmem:[%s369 + $0x88] sm:$0xff]
        %v463 = vld [vmem:[%s369 + $0x90] sm:$0xff]
        %v464 = vld [vmem:[%s369 + $0x98] sm:$0xff]
        %v465 = vld [vmem:[%s369 + $0xa0] sm:$0xff]
        %v466 = vld [vmem:[%s369 + $0xa8] sm:$0xff]
        %v467 = vld [vmem:[%s369 + $0xb0] sm:$0xff]
        %v468 = vld [vmem:[%s369 + $0xb8] sm:$0xff]
        %v469 = vld [vmem:[%s369 + $0xc0] sm:$0xff]
        %v470 = vld [vmem:[%s369 + $0xc8] sm:$0xff]
        %v471 = vld [vmem:[%s369 + $0xd0] sm:$0xff]
        %v472 = vld [vmem:[%s369 + $0xd8] sm:$0xff]
        %v473 = vld [vmem:[%s369 + $0xe0] sm:$0xff]
        %v474 = vld [vmem:[%s369 + $0xe8] sm:$0xff]
        %v475 = vld [vmem:[%s369 + $0xf0] sm:$0xff]
        %v476 = vld [vmem:[%s369 + $0xf8] sm:$0xff]
        %v477 = vld [vmem:[%s425] sm:$0xf]
        %v478 = vld [vmem:[%s425 + $0x4] sm:$0xf]
        %v479 = vld [vmem:[%s425 + $0x8] sm:$0xf]
        %v480 = vld [vmem:[%s425 + $0xc] sm:$0xf]
        %v481 = vld [vmem:[%s425 + $0x10] sm:$0xf]
        %v482 = vld [vmem:[%s425 + $0x14] sm:$0xf]
        %v483 = vld [vmem:[%s425 + $0x18] sm:$0xf]
        %v484 = vld [vmem:[%s425 + $0x1c] sm:$0xf]
        %v485 = vld [vmem:[%s425 + $0x20] sm:$0xf]
        %v486 = vld [vmem:[%s425 + $0x24] sm:$0xf]
        %v487 = vld [vmem:[%s425 + $0x28] sm:$0xf]
        %v488 = vld [vmem:[%s425 + $0x2c] sm:$0xf]
        %v489 = vld [vmem:[%s425 + $0x30] sm:$0xf]
        %v490 = vld [vmem:[%s425 + $0x34] sm:$0xf]
        %v491 = vld [vmem:[%s425 + $0x38] sm:$0xf]
        %v492 = vld [vmem:[%s425 + $0x3c] sm:$0xf]
        %v493 = vld [vmem:[%s425 + $0x40] sm:$0xf]
        %v494 = vld [vmem:[%s425 + $0x44] sm:$0xf]
        %v495 = vld [vmem:[%s425 + $0x48] sm:$0xf]
        %v496 = vld [vmem:[%s425 + $0x4c] sm:$0xf]
        %v497 = vld [vmem:[%s425 + $0x50] sm:$0xf]
        %v498 = vld [vmem:[%s425 + $0x54] sm:$0xf]
        %v499 = vld [vmem:[%s425 + $0x58] sm:$0xf]
        %v500 = vld [vmem:[%s425 + $0x5c] sm:$0xf]
        %v501 = vld [vmem:[%s425 + $0x60] sm:$0xf]
        %v502 = vld [vmem:[%s425 + $0x64] sm:$0xf]
        %v503 = vld [vmem:[%s425 + $0x68] sm:$0xf]
        %v504 = vld [vmem:[%s425 + $0x6c] sm:$0xf]
        %v505 = vld [vmem:[%s425 + $0x70] sm:$0xf]
        %v506 = vld [vmem:[%s425 + $0x74] sm:$0xf]
        %v507 = vld [vmem:[%s425 + $0x78] sm:$0xf]
        %v508 = vld [vmem:[%s425 + $0x7c] sm:$0xf]
        %v509 = vld [vmem:[%s3] sm:$0xf]
        %v510 = vld [vmem:[%s3 + $0x4] sm:$0xf]
        %v543 = vunpack.c.l.b16 %v477
        %v544 = vunpack.c.l.b16 %v478
        %v545 = vunpack.c.l.b16 %v479
        %v546 = vunpack.c.l.b16 %v480
        %v547 = vunpack.c.l.b16 %v481
        %v548 = vunpack.c.l.b16 %v482
        %v549 = vunpack.c.l.b16 %v483
        %v550 = vunpack.c.l.b16 %v484
        %v551 = vunpack.c.l.b16 %v485
        %v552 = vunpack.c.l.b16 %v486
        %v553 = vunpack.c.l.b16 %v487
        %v554 = vunpack.c.l.b16 %v488
        %v555 = vunpack.c.l.b16 %v489
        %v556 = vunpack.c.l.b16 %v490
        %v557 = vunpack.c.l.b16 %v491
        %v558 = vunpack.c.l.b16 %v492
        %v559 = vunpack.c.l.b16 %v493
        %v560 = vunpack.c.l.b16 %v494
        %v561 = vunpack.c.l.b16 %v495
        %v562 = vunpack.c.l.b16 %v496
        %v563 = vunpack.c.l.b16 %v497
        %v564 = vunpack.c.l.b16 %v498
        %v565 = vunpack.c.l.b16 %v499
        %v566 = vunpack.c.l.b16 %v500
        %v567 = vunpack.c.l.b16 %v501
        %v568 = vunpack.c.l.b16 %v502
        %v569 = vunpack.c.l.b16 %v503
        %v570 = vunpack.c.l.b16 %v504
        %v571 = vunpack.c.l.b16 %v505
        %v572 = vunpack.c.l.b16 %v506
        %v573 = vunpack.c.l.b16 %v507
        %v574 = vunpack.c.l.b16 %v508
        %v575 = vpack.c.b16 %v544, %v543
        %v576 = vpack.c.b16 %v546, %v545
        %v577 = vpack.c.b16 %v548, %v547
        %v578 = vpack.c.b16 %v550, %v549
        %v579 = vpack.c.b16 %v552, %v551
        %v580 = vpack.c.b16 %v554, %v553
        %v581 = vpack.c.b16 %v556, %v555
        %v582 = vpack.c.b16 %v558, %v557
        %v583 = vpack.c.b16 %v560, %v559
        %v584 = vpack.c.b16 %v562, %v561
        %v585 = vpack.c.b16 %v564, %v563
        %v586 = vpack.c.b16 %v566, %v565
        %v587 = vpack.c.b16 %v568, %v567
        %v588 = vpack.c.b16 %v570, %v569
        %v589 = vpack.c.b16 %v572, %v571
        %v590 = vpack.c.b16 %v574, %v573
        %v593 = vunpack.c.l.b16 %v509
        %v594 = vunpack.c.l.b16 %v510
        %v595 = vpack.c.b16 %v594, %v593
        %vm597 = vcmask 130048
        %v599 = vsel %vm597, %v575, 0
        %v602 = vsel %vm597, %v576, 0
        %v605 = vsel %vm597, %v577, 0
        %v608 = vsel %vm597, %v578, 0
        %v611 = vsel %vm597, %v579, 0
        %v614 = vsel %vm597, %v580, 0
        %v617 = vsel %vm597, %v581, 0
        %v620 = vsel %vm597, %v582, 0
        %v623 = vsel %vm597, %v583, 0
        %v626 = vsel %vm597, %v584, 0
        %v629 = vsel %vm597, %v585, 0
        %v632 = vsel %vm597, %v586, 0
        %v635 = vsel %vm597, %v587, 0
        %v638 = vsel %vm597, %v588, 0
        %v641 = vsel %vm597, %v589, 0
        %v644 = vsel %vm597, %v590, 0
        %646 = vmatprep.subr.bf16.mxu0 0
        %647 = vmatpush1.bf16.msra.mxu0 %v595
        %648 = vmatprep.subr.bf16.mxu0 0
        %649 = vmatpush1.bf16.msra.mxu0 0
        %650 = vmatprep.subr.bf16.mxu0 0
        %651 = vmatpush1.bf16.msra.mxu0 0
        %652 = vmatprep.subr.bf16.mxu0 0
        %653 = vmatpush1.bf16.msra.mxu0 0
        %654 = vmatprep.subr.bf16.mxu0 0
        %655 = vmatpush1.bf16.msra.mxu0 0
        %656 = vmatprep.subr.bf16.mxu0 0
        %657 = vmatpush1.bf16.msra.mxu0 0
        %658 = vmatprep.subr.bf16.mxu0 0
        %659 = vmatpush1.bf16.msra.mxu0 0
        %660 = vmatprep.subr.bf16.mxu0 0
        %661 = vmatpush1.bf16.msra.mxu0 0
        %662 = vmatprep.subr.bf16.mxu0 0
        %663 = vmatpush1.bf16.msra.mxu0 0
        %664 = vmatprep.subr.bf16.mxu0 0
        %665 = vmatpush1.bf16.msra.mxu0 0
        %666 = vmatprep.subr.bf16.mxu0 0
        %667 = vmatpush1.bf16.msra.mxu0 0
        %668 = vmatprep.subr.bf16.mxu0 0
        %669 = vmatpush1.bf16.msra.mxu0 0
        %670 = vmatprep.subr.bf16.mxu0 0
        %671 = vmatpush1.bf16.msra.mxu0 0
        %672 = vmatprep.subr.bf16.mxu0 0
        %673 = vmatpush1.bf16.msra.mxu0 0
        %674 = vmatprep.subr.bf16.mxu0 0
        %675 = vmatpush1.bf16.msra.mxu0 0
        %676 = vmatprep.subr.bf16.mxu0 0
        %677 = vmatpush1.bf16.msra.mxu0 0
        %678 = vmatprep.mubr.bf16.mxu0 0
        %679 = vmatmul.mubr.bf16.gmra.mrb[0].mxu0 %v599
        %v680 = vpop.f32.mrb[0].mxu0
        %v681 = vadd.f32 0.0, %v680
        %v682 = vpop.f32.mrb[0].mxu0
        %v683 = vpop.f32.mrb[0].mxu0
        %v684 = vadd.f32 0.0, %v683
        %v685 = vpop.f32.mrb[0].mxu0
        %686 = vmatprep.mubr.bf16.mxu0 0
        %687 = vmatmul.mubr.bf16.gmra.mrb[0].mxu0 %v602
        %v688 = vpop.f32.mrb[0].mxu0
        %v689 = vadd.f32 0.0, %v688
        %v690 = vpop.f32.mrb[0].mxu0
        %v691 = vpop.f32.mrb[0].mxu0
        %v692 = vadd.f32 0.0, %v691
        %v693 = vpop.f32.mrb[0].mxu0
        %694 = vmatprep.mubr.bf16.mxu0 0
        %695 = vmatmul.mubr.bf16.gmra.mrb[0].mxu0 %v605
        %v696 = vpop.f32.mrb[0].mxu0
        %v697 = vadd.f32 0.0, %v696
        %v698 = vpop.f32.mrb[0].mxu0
        %v699 = vpop.f32.mrb[0].mxu0
        %v700 = vadd.f32 0.0, %v699
        %v701 = vpop.f32.mrb[0].mxu0
        %702 = vmatprep.mubr.bf16.mxu0 0
        %703 = vmatmul.mubr.bf16.gmra.mrb[0].mxu0 %v608
        %v704 = vpop.f32.mrb[0].mxu0
        %v705 = vadd.f32 0.0, %v704
        %v706 = vpop.f32.mrb[0].mxu0
        %v707 = vpop.f32.mrb[0].mxu0
        %v708 = vadd.f32 0.0, %v707
        %v709 = vpop.f32.mrb[0].mxu0
        %710 = vmatprep.mubr.bf16.mxu0 0
        %711 = vmatmul.mubr.bf16.gmra.mrb[0].mxu0 %v611
        %v712 = vpop.f32.mrb[0].mxu0
        %v713 = vadd.f32 0.0, %v712
        %v714 = vpop.f32.mrb[0].mxu0
        %v715 = vpop.f32.mrb[0].mxu0
        %v716 = vadd.f32 0.0, %v715
        %v717 = vpop.f32.mrb[0].mxu0
        %718 = vmatprep.mubr.bf16.mxu0 0
        %719 = vmatmul.mubr.bf16.gmra.mrb[0].mxu0 %v614
        %v720 = vpop.f32.mrb[0].mxu0
        %v721 = vadd.f32 0.0, %v720
        %v722 = vpop.f32.mrb[0].mxu0
        %v723 = vpop.f32.mrb[0].mxu0
        %v724 = vadd.f32 0.0, %v723
        %v725 = vpop.f32.mrb[0].mxu0
        %726 = vmatprep.mubr.bf16.mxu0 0
        %727 = vmatmul.mubr.bf16.gmra.mrb[0].mxu0 %v617
        %v728 = vpop.f32.mrb[0].mxu0
        %v729 = vadd.f32 0.0, %v728
        %v730 = vpop.f32.mrb[0].mxu0
        %v731 = vpop.f32.mrb[0].mxu0
        %v732 = vadd.f32 0.0, %v731
        %v733 = vpop.f32.mrb[0].mxu0
        %734 = vmatprep.mubr.bf16.mxu0 0
        %735 = vmatmul.mubr.bf16.gmra.mrb[0].mxu0 %v620
        %v736 = vpop.f32.mrb[0].mxu0
        %v737 = vadd.f32 0.0, %v736
        %v738 = vpop.f32.mrb[0].mxu0
        %v739 = vpop.f32.mrb[0].mxu0
        %v740 = vadd.f32 0.0, %v739
        %v741 = vpop.f32.mrb[0].mxu0
        %742 = vmatprep.mubr.bf16.mxu0 0
        %743 = vmatmul.mubr.bf16.gmra.mrb[0].mxu0 %v623
        %v744 = vpop.f32.mrb[0].mxu0
        %v745 = vadd.f32 0.0, %v744
        %v746 = vpop.f32.mrb[0].mxu0
        %v747 = vpop.f32.mrb[0].mxu0
        %v748 = vadd.f32 0.0, %v747
        %v749 = vpop.f32.mrb[0].mxu0
        %750 = vmatprep.mubr.bf16.mxu0 0
        %751 = vmatmul.mubr.bf16.gmra.mrb[0].mxu0 %v626
        %v752 = vpop.f32.mrb[0].mxu0
        %v753 = vadd.f32 0.0, %v752
        %v754 = vpop.f32.mrb[0].mxu0
        %v755 = vpop.f32.mrb[0].mxu0
        %v756 = vadd.f32 0.0, %v755
        %v757 = vpop.f32.mrb[0].mxu0
        %758 = vmatprep.mubr.bf16.mxu0 0
        %759 = vmatmul.mubr.bf16.gmra.mrb[0].mxu0 %v629
        %v760 = vpop.f32.mrb[0].mxu0
        %v761 = vadd.f32 0.0, %v760
        %v762 = vpop.f32.mrb[0].mxu0
        %v763 = vpop.f32.mrb[0].mxu0
        %v764 = vadd.f32 0.0, %v763
        %v765 = vpop.f32.mrb[0].mxu0
        %766 = vmatprep.mubr.bf16.mxu0 0
        %767 = vmatmul.mubr.bf16.gmra.mrb[0].mxu0 %v632
        %v768 = vpop.f32.mrb[0].mxu0
        %v769 = vadd.f32 0.0, %v768
        %v770 = vpop.f32.mrb[0].mxu0
        %v771 = vpop.f32.mrb[0].mxu0
        %v772 = vadd.f32 0.0, %v771
        %v773 = vpop.f32.mrb[0].mxu0
        %774 = vmatprep.mubr.bf16.mxu0 0
        %775 = vmatmul.mubr.bf16.gmra.mrb[0].mxu0 %v635
        %v776 = vpop.f32.mrb[0].mxu0
        %v777 = vadd.f32 0.0, %v776
        %v778 = vpop.f32.mrb[0].mxu0
        %v779 = vpop.f32.mrb[0].mxu0
        %v780 = vadd.f32 0.0, %v779
        %v781 = vpop.f32.mrb[0].mxu0
        %782 = vmatprep.mubr.bf16.mxu0 0
        %783 = vmatmul.mubr.bf16.gmra.mrb[0].mxu0 %v638
        %v784 = vpop.f32.mrb[0].mxu0
        %v785 = vadd.f32 0.0, %v784
        %v786 = vpop.f32.mrb[0].mxu0
        %v787 = vpop.f32.mrb[0].mxu0
        %v788 = vadd.f32 0.0, %v787
        %v789 = vpop.f32.mrb[0].mxu0
        %790 = vmatprep.mubr.bf16.mxu0 0
        %791 = vmatmul.mubr.bf16.gmra.mrb[0].mxu0 %v641
        %v792 = vpop.f32.mrb[0].mxu0
        %v793 = vadd.f32 0.0, %v792
        %v794 = vpop.f32.mrb[0].mxu0
        %v795 = vpop.f32.mrb[0].mxu0
        %v796 = vadd.f32 0.0, %v795
        %v797 = vpop.f32.mrb[0].mxu0
        %798 = vmatprep.mubr.bf16.mxu0 0
        %799 = vmatmul.mubr.bf16.gmra.mrb[0].mxu0 %v644
        %v800 = vpop.f32.mrb[0].mxu0
        %v801 = vadd.f32 0.0, %v800
        %v802 = vpop.f32.mrb[0].mxu0
        %v803 = vpop.f32.mrb[0].mxu0
        %v804 = vadd.f32 0.0, %v803
        %v805 = vpop.f32.mrb[0].mxu0
        %806 = vdwg.mxu0
        %v807 = vpack.c.bf16 %v684, %v681
        %v808 = vpack.c.bf16 %v692, %v689
        %v809 = vpack.c.bf16 %v700, %v697
        %v810 = vpack.c.bf16 %v708, %v705
        %v811 = vpack.c.bf16 %v716, %v713
        %v812 = vpack.c.bf16 %v724, %v721
        %v813 = vpack.c.bf16 %v732, %v729
        %v814 = vpack.c.bf16 %v740, %v737
        %v815 = vpack.c.bf16 %v748, %v745
        %v816 = vpack.c.bf16 %v756, %v753
        %v817 = vpack.c.bf16 %v764, %v761
        %v818 = vpack.c.bf16 %v772, %v769
        %v819 = vpack.c.bf16 %v780, %v777
        %v820 = vpack.c.bf16 %v788, %v785
        %v821 = vpack.c.bf16 %v796, %v793
        %v822 = vpack.c.bf16 %v804, %v801
        %v823 = vld [vmem:[%s4] sm:$0x1]
        %v825 = vlaneseq
        %v826 = vshrl.u32 %v825, 7
        %v827 = vsub.s32 0, %v826
        %v828 = vrot.slane %v823, %v827
        %v862 = vunpack.c.l.b16 %v445
        %v863 = vunpack.c.h.b16 %v445
        %v864 = vunpack.c.l.b16 %v446
        %v865 = vunpack.c.h.b16 %v446
        %v866 = vunpack.c.l.b16 %v447
        %v867 = vunpack.c.h.b16 %v447
        %v868 = vunpack.c.l.b16 %v448
        %v869 = vunpack.c.h.b16 %v448
        %v870 = vunpack.c.l.b16 %v449
        %v871 = vunpack.c.h.b16 %v449
        %v872 = vunpack.c.l.b16 %v450
        %v873 = vunpack.c.h.b16 %v450
        %v874 = vunpack.c.l.b16 %v451
        %v875 = vunpack.c.h.b16 %v451
        %v876 = vunpack.c.l.b16 %v452
        %v877 = vunpack.c.h.b16 %v452
        %v878 = vunpack.c.l.b16 %v453
        %v879 = vunpack.c.h.b16 %v453
        %v880 = vunpack.c.l.b16 %v454
        %v881 = vunpack.c.h.b16 %v454
        %v882 = vunpack.c.l.b16 %v455
        %v883 = vunpack.c.h.b16 %v455
        %v884 = vunpack.c.l.b16 %v456
        %v885 = vunpack.c.h.b16 %v456
        %v886 = vunpack.c.l.b16 %v457
        %v887 = vunpack.c.h.b16 %v457
        %v888 = vunpack.c.l.b16 %v458
        %v889 = vunpack.c.h.b16 %v458
        %v890 = vunpack.c.l.b16 %v459
        %v891 = vunpack.c.h.b16 %v459
        %v892 = vunpack.c.l.b16 %v460
        %v893 = vunpack.c.h.b16 %v460
        %v894 = vunpack.c.l.b16 %v461
        %v895 = vunpack.c.h.b16 %v461
        %v896 = vunpack.c.l.b16 %v462
        %v897 = vunpack.c.h.b16 %v462
        %v898 = vunpack.c.l.b16 %v463
        %v899 = vunpack.c.h.b16 %v463
        %v900 = vunpack.c.l.b16 %v464
        %v901 = vunpack.c.h.b16 %v464
        %v902 = vunpack.c.l.b16 %v465
        %v903 = vunpack.c.h.b16 %v465
        %v904 = vunpack.c.l.b16 %v466
        %v905 = vunpack.c.h.b16 %v466
        %v906 = vunpack.c.l.b16 %v467
        %v907 = vunpack.c.h.b16 %v467
        %v908 = vunpack.c.l.b16 %v468
        %v909 = vunpack.c.h.b16 %v468
        %v910 = vunpack.c.l.b16 %v469
        %v911 = vunpack.c.h.b16 %v469
        %v912 = vunpack.c.l.b16 %v470
        %v913 = vunpack.c.h.b16 %v470
        %v914 = vunpack.c.l.b16 %v471
        %v915 = vunpack.c.h.b16 %v471
        %v916 = vunpack.c.l.b16 %v472
        %v917 = vunpack.c.h.b16 %v472
        %v918 = vunpack.c.l.b16 %v473
        %v919 = vunpack.c.h.b16 %v473
        %v920 = vunpack.c.l.b16 %v474
        %v921 = vunpack.c.h.b16 %v474
        %v922 = vunpack.c.l.b16 %v475
        %v923 = vunpack.c.h.b16 %v475
        %v924 = vunpack.c.l.b16 %v476
        %v925 = vunpack.c.h.b16 %v476
        %v926 = vpack.c.b16 %v864, %v862
        %v927 = vpack.c.b16 %v865, %v863
        %v928 = vpack.c.b16 %v868, %v866
        %v929 = vpack.c.b16 %v869, %v867
        %v930 = vpack.c.b16 %v872, %v870
        %v931 = vpack.c.b16 %v873, %v871
        %v932 = vpack.c.b16 %v876, %v874
        %v933 = vpack.c.b16 %v877, %v875
        %v934 = vpack.c.b16 %v880, %v878
        %v935 = vpack.c.b16 %v881, %v879
        %v936 = vpack.c.b16 %v884, %v882
        %v937 = vpack.c.b16 %v885, %v883
        %v938 = vpack.c.b16 %v888, %v886
        %v939 = vpack.c.b16 %v889, %v887
        %v940 = vpack.c.b16 %v892, %v890
        %v941 = vpack.c.b16 %v893, %v891
        %v942 = vpack.c.b16 %v896, %v894
        %v943 = vpack.c.b16 %v897, %v895
        %v944 = vpack.c.b16 %v900, %v898
        %v945 = vpack.c.b16 %v901, %v899
        %v946 = vpack.c.b16 %v904, %v902
        %v947 = vpack.c.b16 %v905, %v903
        %v948 = vpack.c.b16 %v908, %v906
        %v949 = vpack.c.b16 %v909, %v907
        %v950 = vpack.c.b16 %v912, %v910
        %v951 = vpack.c.b16 %v913, %v911
        %v952 = vpack.c.b16 %v916, %v914
        %v953 = vpack.c.b16 %v917, %v915
        %v954 = vpack.c.b16 %v920, %v918
        %v955 = vpack.c.b16 %v921, %v919
        %v956 = vpack.c.b16 %v924, %v922
        %v957 = vpack.c.b16 %v925, %v923
        %990 = vmatprep.subr.bf16.mxu0 0
        %991 = vmatpush1.bf16.msra.mxu0 %v807
        %992 = vmatprep.subr.bf16.mxu0 0
        %993 = vmatpush1.bf16.msra.mxu0 %v808
        %994 = vmatprep.subr.bf16.mxu0 0
        %995 = vmatpush1.bf16.msra.mxu0 %v809
        %996 = vmatprep.subr.bf16.mxu0 0
        %997 = vmatpush1.bf16.msra.mxu0 %v810
        %998 = vmatprep.subr.bf16.mxu0 0
        %999 = vmatpush1.bf16.msra.mxu0 %v811
        %1000 = vmatprep.subr.bf16.mxu0 0
        %1001 = vmatpush1.bf16.msra.mxu0 %v812
        %1002 = vmatprep.subr.bf16.mxu0 0
        %1003 = vmatpush1.bf16.msra.mxu0 %v813
        %1004 = vmatprep.subr.bf16.mxu0 0
        %1005 = vmatpush1.bf16.msra.mxu0 %v814
        %1006 = vmatprep.subr.bf16.mxu0 0
        %1007 = vmatpush1.bf16.msra.mxu0 %v815
        %1008 = vmatprep.subr.bf16.mxu0 0
        %1009 = vmatpush1.bf16.msra.mxu0 %v816
        %1010 = vmatprep.subr.bf16.mxu0 0
        %1011 = vmatpush1.bf16.msra.mxu0 %v817
        %1012 = vmatprep.subr.bf16.mxu0 0
        %1013 = vmatpush1.bf16.msra.mxu0 %v818
        %1014 = vmatprep.subr.bf16.mxu0 0
        %1015 = vmatpush1.bf16.msra.mxu0 %v819
        %1016 = vmatprep.subr.bf16.mxu0 0
        %1017 = vmatpush1.bf16.msra.mxu0 %v820
        %1018 = vmatprep.subr.bf16.mxu0 0
        %1019 = vmatpush1.bf16.msra.mxu0 %v821
        %1020 = vmatprep.subr.bf16.mxu0 0
        %1021 = vmatpush1.bf16.msra.mxu0 %v822
        %1022 = vmatprep.mubr.bf16.mxu0 %v927
        %1023 = vmatmul.mubr.bf16.gmra.mrb[0].mxu0 %v926
        %v1024 = vpop.f32.mrb[0].mxu0
        %v1025 = vadd.f32 %v828, %v1024
        %v1026 = vpop.f32.mrb[0].mxu0
        %v1027 = vpop.f32.mrb[0].mxu0
        %v1028 = vadd.f32 %v828, %v1027
        %v1029 = vpop.f32.mrb[0].mxu0
        %1030 = vmatprep.mubr.bf16.mxu0 %v929
        %1031 = vmatmul.mubr.bf16.gmra.mrb[0].mxu0 %v928
        %v1032 = vpop.f32.mrb[0].mxu0
        %v1033 = vadd.f32 %v828, %v1032
        %v1034 = vpop.f32.mrb[0].mxu0
        %v1035 = vpop.f32.mrb[0].mxu0
        %v1036 = vadd.f32 %v828, %v1035
        %v1037 = vpop.f32.mrb[0].mxu0
        %1038 = vmatprep.mubr.bf16.mxu0 %v931
        %1039 = vmatmul.mubr.bf16.gmra.mrb[0].mxu0 %v930
        %v1040 = vpop.f32.mrb[0].mxu0
        %v1041 = vadd.f32 %v828, %v1040
        %v1042 = vpop.f32.mrb[0].mxu0
        %v1043 = vpop.f32.mrb[0].mxu0
        %v1044 = vadd.f32 %v828, %v1043
        %v1045 = vpop.f32.mrb[0].mxu0
        %1046 = vmatprep.mubr.bf16.mxu0 %v933
        %1047 = vmatmul.mubr.bf16.gmra.mrb[0].mxu0 %v932
        %v1048 = vpop.f32.mrb[0].mxu0
        %v1049 = vadd.f32 %v828, %v1048
        %v1050 = vpop.f32.mrb[0].mxu0
        %v1051 = vpop.f32.mrb[0].mxu0
        %v1052 = vadd.f32 %v828, %v1051
        %v1053 = vpop.f32.mrb[0].mxu0
        %1054 = vmatprep.mubr.bf16.mxu0 %v935
        %1055 = vmatmul.mubr.bf16.gmra.mrb[0].mxu0 %v934
        %v1056 = vpop.f32.mrb[0].mxu0
        %v1057 = vadd.f32 %v828, %v1056
        %v1058 = vpop.f32.mrb[0].mxu0
        %v1059 = vpop.f32.mrb[0].mxu0
        %v1060 = vadd.f32 %v828, %v1059
        %v1061 = vpop.f32.mrb[0].mxu0
        %1062 = vmatprep.mubr.bf16.mxu0 %v937
        %1063 = vmatmul.mubr.bf16.gmra.mrb[0].mxu0 %v936
        %v1064 = vpop.f32.mrb[0].mxu0
        %v1065 = vadd.f32 %v828, %v1064
        %v1066 = vpop.f32.mrb[0].mxu0
        %v1067 = vpop.f32.mrb[0].mxu0
        %v1068 = vadd.f32 %v828, %v1067
        %v1069 = vpop.f32.mrb[0].mxu0
        %1070 = vmatprep.mubr.bf16.mxu0 %v939
        %1071 = vmatmul.mubr.bf16.gmra.mrb[0].mxu0 %v938
        %v1072 = vpop.f32.mrb[0].mxu0
        %v1073 = vadd.f32 %v828, %v1072
        %v1074 = vpop.f32.mrb[0].mxu0
        %v1075 = vpop.f32.mrb[0].mxu0
        %v1076 = vadd.f32 %v828, %v1075
        %v1077 = vpop.f32.mrb[0].mxu0
        %1078 = vmatprep.mubr.bf16.mxu0 %v941
        %1079 = vmatmul.mubr.bf16.gmra.mrb[0].mxu0 %v940
        %v1080 = vpop.f32.mrb[0].mxu0
        %v1081 = vadd.f32 %v828, %v1080
        %v1082 = vpop.f32.mrb[0].mxu0
        %v1083 = vpop.f32.mrb[0].mxu0
        %v1084 = vadd.f32 %v828, %v1083
        %v1085 = vpop.f32.mrb[0].mxu0
        %1086 = vmatprep.mubr.bf16.mxu0 %v943
        %1087 = vmatmul.mubr.bf16.gmra.mrb[0].mxu0 %v942
        %v1088 = vpop.f32.mrb[0].mxu0
        %v1089 = vadd.f32 %v828, %v1088
        %v1090 = vpop.f32.mrb[0].mxu0
        %v1091 = vpop.f32.mrb[0].mxu0
        %v1092 = vadd.f32 %v828, %v1091
        %v1093 = vpop.f32.mrb[0].mxu0
        %1094 = vmatprep.mubr.bf16.mxu0 %v945
        %1095 = vmatmul.mubr.bf16.gmra.mrb[0].mxu0 %v944
        %v1096 = vpop.f32.mrb[0].mxu0
        %v1097 = vadd.f32 %v828, %v1096
        %v1098 = vpop.f32.mrb[0].mxu0
        %v1099 = vpop.f32.mrb[0].mxu0
        %v1100 = vadd.f32 %v828, %v1099
        %v1101 = vpop.f32.mrb[0].mxu0
        %1102 = vmatprep.mubr.bf16.mxu0 %v947
        %1103 = vmatmul.mubr.bf16.gmra.mrb[0].mxu0 %v946
        %v1104 = vpop.f32.mrb[0].mxu0
        %v1105 = vadd.f32 %v828, %v1104
        %v1106 = vpop.f32.mrb[0].mxu0
        %v1107 = vpop.f32.mrb[0].mxu0
        %v1108 = vadd.f32 %v828, %v1107
        %v1109 = vpop.f32.mrb[0].mxu0
        %1110 = vmatprep.mubr.bf16.mxu0 %v949
        %1111 = vmatmul.mubr.bf16.gmra.mrb[0].mxu0 %v948
        %v1112 = vpop.f32.mrb[0].mxu0
        %v1113 = vadd.f32 %v828, %v1112
        %v1114 = vpop.f32.mrb[0].mxu0
        %v1115 = vpop.f32.mrb[0].mxu0
        %v1116 = vadd.f32 %v828, %v1115
        %v1117 = vpop.f32.mrb[0].mxu0
        %1118 = vmatprep.mubr.bf16.mxu0 %v951
        %1119 = vmatmul.mubr.bf16.gmra.mrb[0].mxu0 %v950
        %v1120 = vpop.f32.mrb[0].mxu0
        %v1121 = vadd.f32 %v828, %v1120
        %v1122 = vpop.f32.mrb[0].mxu0
        %v1123 = vpop.f32.mrb[0].mxu0
        %v1124 = vadd.f32 %v828, %v1123
        %v1125 = vpop.f32.mrb[0].mxu0
        %1126 = vmatprep.mubr.bf16.mxu0 %v953
        %1127 = vmatmul.mubr.bf16.gmra.mrb[0].mxu0 %v952
        %v1128 = vpop.f32.mrb[0].mxu0
        %v1129 = vadd.f32 %v828, %v1128
        %v1130 = vpop.f32.mrb[0].mxu0
        %v1131 = vpop.f32.mrb[0].mxu0
        %v1132 = vadd.f32 %v828, %v1131
        %v1133 = vpop.f32.mrb[0].mxu0
        %1134 = vmatprep.mubr.bf16.mxu0 %v955
        %1135 = vmatmul.mubr.bf16.gmra.mrb[0].mxu0 %v954
        %v1136 = vpop.f32.mrb[0].mxu0
        %v1137 = vadd.f32 %v828, %v1136
        %v1138 = vpop.f32.mrb[0].mxu0
        %v1139 = vpop.f32.mrb[0].mxu0
        %v1140 = vadd.f32 %v828, %v1139
        %v1141 = vpop.f32.mrb[0].mxu0
        %1142 = vmatprep.mubr.bf16.mxu0 %v957
        %1143 = vmatmul.mubr.bf16.gmra.mrb[0].mxu0 %v956
        %v1144 = vpop.f32.mrb[0].mxu0
        %v1145 = vadd.f32 %v828, %v1144
        %v1146 = vpop.f32.mrb[0].mxu0
        %v1147 = vpop.f32.mrb[0].mxu0
        %v1148 = vadd.f32 %v828, %v1147
        %v1149 = vpop.f32.mrb[0].mxu0
        %1150 = vdwg.mxu0
        %v1151 = vmax.f32 %v1025, 0.0
        %v1152 = vmax.f32 %v1028, 0.0
        %v1153 = vmax.f32 %v1033, 0.0
        %v1154 = vmax.f32 %v1036, 0.0
        %v1155 = vmax.f32 %v1041, 0.0
        %v1156 = vmax.f32 %v1044, 0.0
        %v1157 = vmax.f32 %v1049, 0.0
        %v1158 = vmax.f32 %v1052, 0.0
        %v1159 = vmax.f32 %v1057, 0.0
        %v1160 = vmax.f32 %v1060, 0.0
        %v1161 = vmax.f32 %v1065, 0.0
        %v1162 = vmax.f32 %v1068, 0.0
        %v1163 = vmax.f32 %v1073, 0.0
        %v1164 = vmax.f32 %v1076, 0.0
        %v1165 = vmax.f32 %v1081, 0.0
        %v1166 = vmax.f32 %v1084, 0.0
        %v1167 = vmax.f32 %v1089, 0.0
        %v1168 = vmax.f32 %v1092, 0.0
        %v1169 = vmax.f32 %v1097, 0.0
        %v1170 = vmax.f32 %v1100, 0.0
        %v1171 = vmax.f32 %v1105, 0.0
        %v1172 = vmax.f32 %v1108, 0.0
        %v1173 = vmax.f32 %v1113, 0.0
        %v1174 = vmax.f32 %v1116, 0.0
        %v1175 = vmax.f32 %v1121, 0.0
        %v1176 = vmax.f32 %v1124, 0.0
        %v1177 = vmax.f32 %v1129, 0.0
        %v1178 = vmax.f32 %v1132, 0.0
        %v1179 = vmax.f32 %v1137, 0.0
        %v1180 = vmax.f32 %v1140, 0.0
        %v1181 = vmax.f32 %v1145, 0.0
        %v1182 = vmax.f32 %v1148, 0.0
        %v1183 = vpack.c.bf16 %v1152, %v1151
        %v1184 = vpack.c.bf16 %v1154, %v1153
        %v1185 = vpack.c.bf16 %v1156, %v1155
        %v1186 = vpack.c.bf16 %v1158, %v1157
        %v1187 = vpack.c.bf16 %v1160, %v1159
        %v1188 = vpack.c.bf16 %v1162, %v1161
        %v1189 = vpack.c.bf16 %v1164, %v1163
        %v1190 = vpack.c.bf16 %v1166, %v1165
        %v1191 = vpack.c.bf16 %v1168, %v1167
        %v1192 = vpack.c.bf16 %v1170, %v1169
        %v1193 = vpack.c.bf16 %v1172, %v1171
        %v1194 = vpack.c.bf16 %v1174, %v1173
        %v1195 = vpack.c.bf16 %v1176, %v1175
        %v1196 = vpack.c.bf16 %v1178, %v1177
        %v1197 = vpack.c.bf16 %v1180, %v1179
        %v1198 = vpack.c.bf16 %v1182, %v1181
        %v1199 = vld [vmem:[%s5] sm:$0xf]
        %v1200 = vld [vmem:[%s5 + $0x4] sm:$0xf]
        %v1201 = vld [vmem:[%s5 + $0x8] sm:$0xf]
        %v1202 = vld [vmem:[%s5 + $0xc] sm:$0xf]
        %v1207 = vunpack.c.l.b16 %v1199
        %v1208 = vunpack.c.l.b16 %v1200
        %v1209 = vunpack.c.l.b16 %v1201
        %v1210 = vunpack.c.l.b16 %v1202
        %v1211 = vpack.c.b16 %v1208, %v1207
        %v1212 = vpack.c.b16 %v1210, %v1209
        %vm1215 = vcmask 261120
        %v1217 = vsel %vm1215, %v1183, 0
        %v1220 = vsel %vm1215, %v1184, 0
        %v1223 = vsel %vm1215, %v1185, 0
        %v1226 = vsel %vm1215, %v1186, 0
        %v1229 = vsel %vm1215, %v1187, 0
        %v1232 = vsel %vm1215, %v1188, 0
        %v1235 = vsel %vm1215, %v1189, 0
        %v1238 = vsel %vm1215, %v1190, 0
        %v1241 = vsel %vm1215, %v1191, 0
        %v1244 = vsel %vm1215, %v1192, 0
        %v1247 = vsel %vm1215, %v1193, 0
        %v1250 = vsel %vm1215, %v1194, 0
        %v1253 = vsel %vm1215, %v1195, 0
        %v1256 = vsel %vm1215, %v1196, 0
        %v1259 = vsel %vm1215, %v1197, 0
        %v1262 = vsel %vm1215, %v1198, 0
        %1264 = vmatprep.subr.bf16.mxu0 0
        %1265 = vmatpush1.bf16.msra.mxu0 %v1211
        %1266 = vmatprep.subr.bf16.mxu0 0
        %1267 = vmatpush1.bf16.msra.mxu0 %v1212
        %1268 = vmatprep.subr.bf16.mxu0 0
        %1269 = vmatpush1.bf16.msra.mxu0 0
        %1270 = vmatprep.subr.bf16.mxu0 0
        %1271 = vmatpush1.bf16.msra.mxu0 0
        %1272 = vmatprep.subr.bf16.mxu0 0
        %1273 = vmatpush1.bf16.msra.mxu0 0
        %1274 = vmatprep.subr.bf16.mxu0 0
        %1275 = vmatpush1.bf16.msra.mxu0 0
        %1276 = vmatprep.subr.bf16.mxu0 0
        %1277 = vmatpush1.bf16.msra.mxu0 0
        %1278 = vmatprep.subr.bf16.mxu0 0
        %1279 = vmatpush1.bf16.msra.mxu0 0
        %1280 = vmatprep.subr.bf16.mxu0 0
        %1281 = vmatpush1.bf16.msra.mxu0 0
        %1282 = vmatprep.subr.bf16.mxu0 0
        %1283 = vmatpush1.bf16.msra.mxu0 0
        %1284 = vmatprep.subr.bf16.mxu0 0
        %1285 = vmatpush1.bf16.msra.mxu0 0
        %1286 = vmatprep.subr.bf16.mxu0 0
        %1287 = vmatpush1.bf16.msra.mxu0 0
        %1288 = vmatprep.subr.bf16.mxu0 0
        %1289 = vmatpush1.bf16.msra.mxu0 0
        %1290 = vmatprep.subr.bf16.mxu0 0
        %1291 = vmatpush1.bf16.msra.mxu0 0
        %1292 = vmatprep.subr.bf16.mxu0 0
        %1293 = vmatpush1.bf16.msra.mxu0 0
        %1294 = vmatprep.subr.bf16.mxu0 0
        %1295 = vmatpush1.bf16.msra.mxu0 0
        %1296 = vmatprep.mubr.bf16.mxu0 0
        %1297 = vmatmul.mubr.bf16.gmra.mrb[0].mxu0 %v1217
        %v1298 = vpop.f32.mrb[0].mxu0
        %v1299 = vadd.f32 0.0, %v1298
        %v1300 = vpop.f32.mrb[0].mxu0
        %v1301 = vpop.f32.mrb[0].mxu0
        %v1302 = vadd.f32 0.0, %v1301
        %v1303 = vpop.f32.mrb[0].mxu0
        %1304 = vmatprep.mubr.bf16.mxu0 0
        %1305 = vmatmul.mubr.bf16.gmra.mrb[0].mxu0 %v1220
        %v1306 = vpop.f32.mrb[0].mxu0
        %v1307 = vadd.f32 0.0, %v1306
        %v1308 = vpop.f32.mrb[0].mxu0
        %v1309 = vpop.f32.mrb[0].mxu0
        %v1310 = vadd.f32 0.0, %v1309
        %v1311 = vpop.f32.mrb[0].mxu0
        %1312 = vmatprep.mubr.bf16.mxu0 0
        %1313 = vmatmul.mubr.bf16.gmra.mrb[0].mxu0 %v1223
        %v1314 = vpop.f32.mrb[0].mxu0
        %v1315 = vadd.f32 0.0, %v1314
        %v1316 = vpop.f32.mrb[0].mxu0
        %v1317 = vpop.f32.mrb[0].mxu0
        %v1318 = vadd.f32 0.0, %v1317
        %v1319 = vpop.f32.mrb[0].mxu0
        %1320 = vmatprep.mubr.bf16.mxu0 0
        %1321 = vmatmul.mubr.bf16.gmra.mrb[0].mxu0 %v1226
        %v1322 = vpop.f32.mrb[0].mxu0
        %v1323 = vadd.f32 0.0, %v1322
        %v1324 = vpop.f32.mrb[0].mxu0
        %v1325 = vpop.f32.mrb[0].mxu0
        %v1326 = vadd.f32 0.0, %v1325
        %v1327 = vpop.f32.mrb[0].mxu0
        %1328 = vmatprep.mubr.bf16.mxu0 0
        %1329 = vmatmul.mubr.bf16.gmra.mrb[0].mxu0 %v1229
        %v1330 = vpop.f32.mrb[0].mxu0
        %v1331 = vadd.f32 0.0, %v1330
        %v1332 = vpop.f32.mrb[0].mxu0
        %v1333 = vpop.f32.mrb[0].mxu0
        %v1334 = vadd.f32 0.0, %v1333
        %v1335 = vpop.f32.mrb[0].mxu0
        %1336 = vmatprep.mubr.bf16.mxu0 0
        %1337 = vmatmul.mubr.bf16.gmra.mrb[0].mxu0 %v1232
        %v1338 = vpop.f32.mrb[0].mxu0
        %v1339 = vadd.f32 0.0, %v1338
        %v1340 = vpop.f32.mrb[0].mxu0
        %v1341 = vpop.f32.mrb[0].mxu0
        %v1342 = vadd.f32 0.0, %v1341
        %v1343 = vpop.f32.mrb[0].mxu0
        %1344 = vmatprep.mubr.bf16.mxu0 0
        %1345 = vmatmul.mubr.bf16.gmra.mrb[0].mxu0 %v1235
        %v1346 = vpop.f32.mrb[0].mxu0
        %v1347 = vadd.f32 0.0, %v1346
        %v1348 = vpop.f32.mrb[0].mxu0
        %v1349 = vpop.f32.mrb[0].mxu0
        %v1350 = vadd.f32 0.0, %v1349
        %v1351 = vpop.f32.mrb[0].mxu0
        %1352 = vmatprep.mubr.bf16.mxu0 0
        %1353 = vmatmul.mubr.bf16.gmra.mrb[0].mxu0 %v1238
        %v1354 = vpop.f32.mrb[0].mxu0
        %v1355 = vadd.f32 0.0, %v1354
        %v1356 = vpop.f32.mrb[0].mxu0
        %v1357 = vpop.f32.mrb[0].mxu0
        %v1358 = vadd.f32 0.0, %v1357
        %v1359 = vpop.f32.mrb[0].mxu0
        %1360 = vmatprep.mubr.bf16.mxu0 0
        %1361 = vmatmul.mubr.bf16.gmra.mrb[0].mxu0 %v1241
        %v1362 = vpop.f32.mrb[0].mxu0
        %v1363 = vadd.f32 0.0, %v1362
        %v1364 = vpop.f32.mrb[0].mxu0
        %v1365 = vpop.f32.mrb[0].mxu0
        %v1366 = vadd.f32 0.0, %v1365
        %v1367 = vpop.f32.mrb[0].mxu0
        %1368 = vmatprep.mubr.bf16.mxu0 0
        %1369 = vmatmul.mubr.bf16.gmra.mrb[0].mxu0 %v1244
        %v1370 = vpop.f32.mrb[0].mxu0
        %v1371 = vadd.f32 0.0, %v1370
        %v1372 = vpop.f32.mrb[0].mxu0
        %v1373 = vpop.f32.mrb[0].mxu0
        %v1374 = vadd.f32 0.0, %v1373
        %v1375 = vpop.f32.mrb[0].mxu0
        %1376 = vmatprep.mubr.bf16.mxu0 0
        %1377 = vmatmul.mubr.bf16.gmra.mrb[0].mxu0 %v1247
        %v1378 = vpop.f32.mrb[0].mxu0
        %v1379 = vadd.f32 0.0, %v1378
        %v1380 = vpop.f32.mrb[0].mxu0
        %v1381 = vpop.f32.mrb[0].mxu0
        %v1382 = vadd.f32 0.0, %v1381
        %v1383 = vpop.f32.mrb[0].mxu0
        %1384 = vmatprep.mubr.bf16.mxu0 0
        %1385 = vmatmul.mubr.bf16.gmra.mrb[0].mxu0 %v1250
        %v1386 = vpop.f32.mrb[0].mxu0
        %v1387 = vadd.f32 0.0, %v1386
        %v1388 = vpop.f32.mrb[0].mxu0
        %v1389 = vpop.f32.mrb[0].mxu0
        %v1390 = vadd.f32 0.0, %v1389
        %v1391 = vpop.f32.mrb[0].mxu0
        %1392 = vmatprep.mubr.bf16.mxu0 0
        %1393 = vmatmul.mubr.bf16.gmra.mrb[0].mxu0 %v1253
        %v1394 = vpop.f32.mrb[0].mxu0
        %v1395 = vadd.f32 0.0, %v1394
        %v1396 = vpop.f32.mrb[0].mxu0
        %v1397 = vpop.f32.mrb[0].mxu0
        %v1398 = vadd.f32 0.0, %v1397
        %v1399 = vpop.f32.mrb[0].mxu0
        %1400 = vmatprep.mubr.bf16.mxu0 0
        %1401 = vmatmul.mubr.bf16.gmra.mrb[0].mxu0 %v1256
        %v1402 = vpop.f32.mrb[0].mxu0
        %v1403 = vadd.f32 0.0, %v1402
        %v1404 = vpop.f32.mrb[0].mxu0
        %v1405 = vpop.f32.mrb[0].mxu0
        %v1406 = vadd.f32 0.0, %v1405
        %v1407 = vpop.f32.mrb[0].mxu0
        %1408 = vmatprep.mubr.bf16.mxu0 0
        %1409 = vmatmul.mubr.bf16.gmra.mrb[0].mxu0 %v1259
        %v1410 = vpop.f32.mrb[0].mxu0
        %v1411 = vadd.f32 0.0, %v1410
        %v1412 = vpop.f32.mrb[0].mxu0
        %v1413 = vpop.f32.mrb[0].mxu0
        %v1414 = vadd.f32 0.0, %v1413
        %v1415 = vpop.f32.mrb[0].mxu0
        %1416 = vmatprep.mubr.bf16.mxu0 0
        %1417 = vmatmul.mubr.bf16.gmra.mrb[0].mxu0 %v1262
        %v1418 = vpop.f32.mrb[0].mxu0
        %v1419 = vadd.f32 0.0, %v1418
        %v1420 = vpop.f32.mrb[0].mxu0
        %v1421 = vpop.f32.mrb[0].mxu0
        %v1422 = vadd.f32 0.0, %v1421
        %v1423 = vpop.f32.mrb[0].mxu0
        %1424 = vdwg.mxu0
        %v1425 = vpack.c.bf16 %v1302, %v1299
        %v1426 = vpack.c.bf16 %v1310, %v1307
        %v1427 = vpack.c.bf16 %v1318, %v1315
        %v1428 = vpack.c.bf16 %v1326, %v1323
        %v1429 = vpack.c.bf16 %v1334, %v1331
        %v1430 = vpack.c.bf16 %v1342, %v1339
        %v1431 = vpack.c.bf16 %v1350, %v1347
        %v1432 = vpack.c.bf16 %v1358, %v1355
        %v1433 = vpack.c.bf16 %v1366, %v1363
        %v1434 = vpack.c.bf16 %v1374, %v1371
        %v1435 = vpack.c.bf16 %v1382, %v1379
        %v1436 = vpack.c.bf16 %v1390, %v1387
        %v1437 = vpack.c.bf16 %v1398, %v1395
        %v1438 = vpack.c.bf16 %v1406, %v1403
        %v1439 = vpack.c.bf16 %v1414, %v1411
        %v1440 = vpack.c.bf16 %v1422, %v1419
        %v1441 = vld [vmem:[%s6] sm:$0x1]
        %v1443 = vlaneseq
        %v1444 = vshrl.u32 %v1443, 7
        %v1445 = vsub.s32 0, %v1444
        %v1446 = vrot.slane %v1441, %v1445
        %1448 = vmatprep.subr.bf16.mxu0 0
        %1449 = vmatpush1.bf16.msra.mxu0 %v1425
        %1450 = vmatprep.subr.bf16.mxu0 0
        %1451 = vmatpush1.bf16.msra.mxu0 %v1426
        %1452 = vmatprep.subr.bf16.mxu0 0
        %1453 = vmatpush1.bf16.msra.mxu0 %v1427
        %1454 = vmatprep.subr.bf16.mxu0 0
        %1455 = vmatpush1.bf16.msra.mxu0 %v1428
        %1456 = vmatprep.subr.bf16.mxu0 0
        %1457 = vmatpush1.bf16.msra.mxu0 %v1429
        %1458 = vmatprep.subr.bf16.mxu0 0
        %1459 = vmatpush1.bf16.msra.mxu0 %v1430
        %1460 = vmatprep.subr.bf16.mxu0 0
        %1461 = vmatpush1.bf16.msra.mxu0 %v1431
        %1462 = vmatprep.subr.bf16.mxu0 0
        %1463 = vmatpush1.bf16.msra.mxu0 %v1432
        %1464 = vmatprep.subr.bf16.mxu0 0
        %1465 = vmatpush1.bf16.msra.mxu0 %v1433
        %1466 = vmatprep.subr.bf16.mxu0 0
        %1467 = vmatpush1.bf16.msra.mxu0 %v1434
        %1468 = vmatprep.subr.bf16.mxu0 0
        %1469 = vmatpush1.bf16.msra.mxu0 %v1435
        %1470 = vmatprep.subr.bf16.mxu0 0
        %1471 = vmatpush1.bf16.msra.mxu0 %v1436
        %1472 = vmatprep.subr.bf16.mxu0 0
        %1473 = vmatpush1.bf16.msra.mxu0 %v1437
        %1474 = vmatprep.subr.bf16.mxu0 0
        %1475 = vmatpush1.bf16.msra.mxu0 %v1438
        %1476 = vmatprep.subr.bf16.mxu0 0
        %1477 = vmatpush1.bf16.msra.mxu0 %v1439
        %1478 = vmatprep.subr.bf16.mxu0 0
        %1479 = vmatpush1.bf16.msra.mxu0 %v1440
        %1480 = vmatprep.mubr.bf16.mxu0 %v927
        %1481 = vmatmul.mubr.bf16.gmra.mrb[0].mxu0 %v926
        %v1482 = vpop.f32.mrb[0].mxu0
        %v1483 = vadd.f32 %v1446, %v1482
        %v1484 = vpop.f32.mrb[0].mxu0
        %v1485 = vpop.f32.mrb[0].mxu0
        %v1486 = vadd.f32 %v1446, %v1485
        %v1487 = vpop.f32.mrb[0].mxu0
        %1488 = vmatprep.mubr.bf16.mxu0 %v929
        %1489 = vmatmul.mubr.bf16.gmra.mrb[0].mxu0 %v928
        %v1490 = vpop.f32.mrb[0].mxu0
        %v1491 = vadd.f32 %v1446, %v1490
        %v1492 = vpop.f32.mrb[0].mxu0
        %v1493 = vpop.f32.mrb[0].mxu0
        %v1494 = vadd.f32 %v1446, %v1493
        %v1495 = vpop.f32.mrb[0].mxu0
        %1496 = vmatprep.mubr.bf16.mxu0 %v931
        %1497 = vmatmul.mubr.bf16.gmra.mrb[0].mxu0 %v930
        %v1498 = vpop.f32.mrb[0].mxu0
        %v1499 = vadd.f32 %v1446, %v1498
        %v1500 = vpop.f32.mrb[0].mxu0
        %v1501 = vpop.f32.mrb[0].mxu0
        %v1502 = vadd.f32 %v1446, %v1501
        %v1503 = vpop.f32.mrb[0].mxu0
        %1504 = vmatprep.mubr.bf16.mxu0 %v933
        %1505 = vmatmul.mubr.bf16.gmra.mrb[0].mxu0 %v932
        %v1506 = vpop.f32.mrb[0].mxu0
        %v1507 = vadd.f32 %v1446, %v1506
        %v1508 = vpop.f32.mrb[0].mxu0
        %v1509 = vpop.f32.mrb[0].mxu0
        %v1510 = vadd.f32 %v1446, %v1509
        %v1511 = vpop.f32.mrb[0].mxu0
        %1512 = vmatprep.mubr.bf16.mxu0 %v935
        %1513 = vmatmul.mubr.bf16.gmra.mrb[0].mxu0 %v934
        %v1514 = vpop.f32.mrb[0].mxu0
        %v1515 = vadd.f32 %v1446, %v1514
        %v1516 = vpop.f32.mrb[0].mxu0
        %v1517 = vpop.f32.mrb[0].mxu0
        %v1518 = vadd.f32 %v1446, %v1517
        %v1519 = vpop.f32.mrb[0].mxu0
        %1520 = vmatprep.mubr.bf16.mxu0 %v937
        %1521 = vmatmul.mubr.bf16.gmra.mrb[0].mxu0 %v936
        %v1522 = vpop.f32.mrb[0].mxu0
        %v1523 = vadd.f32 %v1446, %v1522
        %v1524 = vpop.f32.mrb[0].mxu0
        %v1525 = vpop.f32.mrb[0].mxu0
        %v1526 = vadd.f32 %v1446, %v1525
        %v1527 = vpop.f32.mrb[0].mxu0
        %1528 = vmatprep.mubr.bf16.mxu0 %v939
        %1529 = vmatmul.mubr.bf16.gmra.mrb[0].mxu0 %v938
        %v1530 = vpop.f32.mrb[0].mxu0
        %v1531 = vadd.f32 %v1446, %v1530
        %v1532 = vpop.f32.mrb[0].mxu0
        %v1533 = vpop.f32.mrb[0].mxu0
        %v1534 = vadd.f32 %v1446, %v1533
        %v1535 = vpop.f32.mrb[0].mxu0
        %1536 = vmatprep.mubr.bf16.mxu0 %v941
        %1537 = vmatmul.mubr.bf16.gmra.mrb[0].mxu0 %v940
        %v1538 = vpop.f32.mrb[0].mxu0
        %v1539 = vadd.f32 %v1446, %v1538
        %v1540 = vpop.f32.mrb[0].mxu0
        %v1541 = vpop.f32.mrb[0].mxu0
        %v1542 = vadd.f32 %v1446, %v1541
        %v1543 = vpop.f32.mrb[0].mxu0
        %1544 = vmatprep.mubr.bf16.mxu0 %v943
        %1545 = vmatmul.mubr.bf16.gmra.mrb[0].mxu0 %v942
        %v1546 = vpop.f32.mrb[0].mxu0
        %v1547 = vadd.f32 %v1446, %v1546
        %v1548 = vpop.f32.mrb[0].mxu0
        %v1549 = vpop.f32.mrb[0].mxu0
        %v1550 = vadd.f32 %v1446, %v1549
        %v1551 = vpop.f32.mrb[0].mxu0
        %1552 = vmatprep.mubr.bf16.mxu0 %v945
        %1553 = vmatmul.mubr.bf16.gmra.mrb[0].mxu0 %v944
        %v1554 = vpop.f32.mrb[0].mxu0
        %v1555 = vadd.f32 %v1446, %v1554
        %v1556 = vpop.f32.mrb[0].mxu0
        %v1557 = vpop.f32.mrb[0].mxu0
        %v1558 = vadd.f32 %v1446, %v1557
        %v1559 = vpop.f32.mrb[0].mxu0
        %1560 = vmatprep.mubr.bf16.mxu0 %v947
        %1561 = vmatmul.mubr.bf16.gmra.mrb[0].mxu0 %v946
        %v1562 = vpop.f32.mrb[0].mxu0
        %v1563 = vadd.f32 %v1446, %v1562
        %v1564 = vpop.f32.mrb[0].mxu0
        %v1565 = vpop.f32.mrb[0].mxu0
        %v1566 = vadd.f32 %v1446, %v1565
        %v1567 = vpop.f32.mrb[0].mxu0
        %1568 = vmatprep.mubr.bf16.mxu0 %v949
        %1569 = vmatmul.mubr.bf16.gmra.mrb[0].mxu0 %v948
        %v1570 = vpop.f32.mrb[0].mxu0
        %v1571 = vadd.f32 %v1446, %v1570
        %v1572 = vpop.f32.mrb[0].mxu0
        %v1573 = vpop.f32.mrb[0].mxu0
        %v1574 = vadd.f32 %v1446, %v1573
        %v1575 = vpop.f32.mrb[0].mxu0
        %1576 = vmatprep.mubr.bf16.mxu0 %v951
        %1577 = vmatmul.mubr.bf16.gmra.mrb[0].mxu0 %v950
        %v1578 = vpop.f32.mrb[0].mxu0
        %v1579 = vadd.f32 %v1446, %v1578
        %v1580 = vpop.f32.mrb[0].mxu0
        %v1581 = vpop.f32.mrb[0].mxu0
        %v1582 = vadd.f32 %v1446, %v1581
        %v1583 = vpop.f32.mrb[0].mxu0
        %1584 = vmatprep.mubr.bf16.mxu0 %v953
        %1585 = vmatmul.mubr.bf16.gmra.mrb[0].mxu0 %v952
        %v1586 = vpop.f32.mrb[0].mxu0
        %v1587 = vadd.f32 %v1446, %v1586
        %v1588 = vpop.f32.mrb[0].mxu0
        %v1589 = vpop.f32.mrb[0].mxu0
        %v1590 = vadd.f32 %v1446, %v1589
        %v1591 = vpop.f32.mrb[0].mxu0
        %1592 = vmatprep.mubr.bf16.mxu0 %v955
        %1593 = vmatmul.mubr.bf16.gmra.mrb[0].mxu0 %v954
        %v1594 = vpop.f32.mrb[0].mxu0
        %v1595 = vadd.f32 %v1446, %v1594
        %v1596 = vpop.f32.mrb[0].mxu0
        %v1597 = vpop.f32.mrb[0].mxu0
        %v1598 = vadd.f32 %v1446, %v1597
        %v1599 = vpop.f32.mrb[0].mxu0
        %1600 = vmatprep.mubr.bf16.mxu0 %v957
        %1601 = vmatmul.mubr.bf16.gmra.mrb[0].mxu0 %v956
        %v1602 = vpop.f32.mrb[0].mxu0
        %v1603 = vadd.f32 %v1446, %v1602
        %v1604 = vpop.f32.mrb[0].mxu0
        %v1605 = vpop.f32.mrb[0].mxu0
        %v1606 = vadd.f32 %v1446, %v1605
        %v1607 = vpop.f32.mrb[0].mxu0
        %1608 = vdwg.mxu0
        %v1609 = vpack.c.bf16 %v1486, %v1483
        %v1610 = vpack.c.bf16 %v1494, %v1491
        %v1611 = vpack.c.bf16 %v1502, %v1499
        %v1612 = vpack.c.bf16 %v1510, %v1507
        %v1613 = vpack.c.bf16 %v1518, %v1515
        %v1614 = vpack.c.bf16 %v1526, %v1523
        %v1615 = vpack.c.bf16 %v1534, %v1531
        %v1616 = vpack.c.bf16 %v1542, %v1539
        %v1617 = vpack.c.bf16 %v1550, %v1547
        %v1618 = vpack.c.bf16 %v1558, %v1555
        %v1619 = vpack.c.bf16 %v1566, %v1563
        %v1620 = vpack.c.bf16 %v1574, %v1571
        %v1621 = vpack.c.bf16 %v1582, %v1579
        %v1622 = vpack.c.bf16 %v1590, %v1587
        %v1623 = vpack.c.bf16 %v1598, %v1595
        %v1624 = vpack.c.bf16 %v1606, %v1603
        %v1625 = vld [vmem:[%s7] sm:$0xf]
        %v1626 = vld [vmem:[%s7 + $0x4] sm:$0xf]
        %v1627 = vld [vmem:[%s7 + $0x8] sm:$0xf]
        %v1628 = vld [vmem:[%s7 + $0xc] sm:$0xf]
        %v1629 = vld [vmem:[%s8] sm:$0x1]
        %v1631 = vlaneseq
        %v1632 = vshrl.u32 %v1631, 7
        %v1633 = vsub.s32 0, %v1632
        %v1634 = vrot.slane %v1629, %v1633
        %v1640 = vunpack.c.l.b16 %v1625
        %v1641 = vunpack.c.l.b16 %v1626
        %v1642 = vunpack.c.l.b16 %v1627
        %v1643 = vunpack.c.l.b16 %v1628
        %v1644 = vpack.c.b16 %v1641, %v1640
        %v1645 = vpack.c.b16 %v1643, %v1642
        %v1649 = vsel %vm1215, %v1609, 0
        %v1652 = vsel %vm1215, %v1610, 0
        %v1655 = vsel %vm1215, %v1611, 0
        %v1658 = vsel %vm1215, %v1612, 0
        %v1661 = vsel %vm1215, %v1613, 0
        %v1664 = vsel %vm1215, %v1614, 0
        %v1667 = vsel %vm1215, %v1615, 0
        %v1670 = vsel %vm1215, %v1616, 0
        %v1673 = vsel %vm1215, %v1617, 0
        %v1676 = vsel %vm1215, %v1618, 0
        %v1679 = vsel %vm1215, %v1619, 0
        %v1682 = vsel %vm1215, %v1620, 0
        %v1685 = vsel %vm1215, %v1621, 0
        %v1688 = vsel %vm1215, %v1622, 0
        %v1691 = vsel %vm1215, %v1623, 0
        %v1694 = vsel %vm1215, %v1624, 0
        %1696 = vmatprep.subr.bf16.mxu0 0
        %1697 = vmatpush1.bf16.msra.mxu0 %v1644
        %1698 = vmatprep.subr.bf16.mxu0 0
        %1699 = vmatpush1.bf16.msra.mxu0 %v1645
        %1700 = vmatprep.subr.bf16.mxu0 0
        %1701 = vmatpush1.bf16.msra.mxu0 0
        %1702 = vmatprep.subr.bf16.mxu0 0
        %1703 = vmatpush1.bf16.msra.mxu0 0
        %1704 = vmatprep.subr.bf16.mxu0 0
        %1705 = vmatpush1.bf16.msra.mxu0 0
        %1706 = vmatprep.subr.bf16.mxu0 0
        %1707 = vmatpush1.bf16.msra.mxu0 0
        %1708 = vmatprep.subr.bf16.mxu0 0
        %1709 = vmatpush1.bf16.msra.mxu0 0
        %1710 = vmatprep.subr.bf16.mxu0 0
        %1711 = vmatpush1.bf16.msra.mxu0 0
        %1712 = vmatprep.subr.bf16.mxu0 0
        %1713 = vmatpush1.bf16.msra.mxu0 0
        %1714 = vmatprep.subr.bf16.mxu0 0
        %1715 = vmatpush1.bf16.msra.mxu0 0
        %1716 = vmatprep.subr.bf16.mxu0 0
        %1717 = vmatpush1.bf16.msra.mxu0 0
        %1718 = vmatprep.subr.bf16.mxu0 0
        %1719 = vmatpush1.bf16.msra.mxu0 0
        %1720 = vmatprep.subr.bf16.mxu0 0
        %1721 = vmatpush1.bf16.msra.mxu0 0
        %1722 = vmatprep.subr.bf16.mxu0 0
        %1723 = vmatpush1.bf16.msra.mxu0 0
        %1724 = vmatprep.subr.bf16.mxu0 0
        %1725 = vmatpush1.bf16.msra.mxu0 0
        %1726 = vmatprep.subr.bf16.mxu0 0
        %1727 = vmatpush1.bf16.msra.mxu0 0
        %1728 = vmatprep.mubr.bf16.mxu0 0
        %1729 = vmatmul.mubr.bf16.gmra.mrb[0].mxu0 %v1649
        %v1730 = vpop.f32.mrb[0].mxu0
        %v1731 = vadd.f32 %v1634, %v1730
        %v1732 = vpop.f32.mrb[0].mxu0
        %v1733 = vpop.f32.mrb[0].mxu0
        %v1734 = vadd.f32 %v1634, %v1733
        %v1735 = vpop.f32.mrb[0].mxu0
        %1736 = vmatprep.mubr.bf16.mxu0 0
        %1737 = vmatmul.mubr.bf16.gmra.mrb[0].mxu0 %v1652
        %v1738 = vpop.f32.mrb[0].mxu0
        %v1739 = vadd.f32 %v1634, %v1738
        %v1740 = vpop.f32.mrb[0].mxu0
        %v1741 = vpop.f32.mrb[0].mxu0
        %v1742 = vadd.f32 %v1634, %v1741
        %v1743 = vpop.f32.mrb[0].mxu0
        %1744 = vmatprep.mubr.bf16.mxu0 0
        %1745 = vmatmul.mubr.bf16.gmra.mrb[0].mxu0 %v1655
        %v1746 = vpop.f32.mrb[0].mxu0
        %v1747 = vadd.f32 %v1634, %v1746
        %v1748 = vpop.f32.mrb[0].mxu0
        %v1749 = vpop.f32.mrb[0].mxu0
        %v1750 = vadd.f32 %v1634, %v1749
        %v1751 = vpop.f32.mrb[0].mxu0
        %1752 = vmatprep.mubr.bf16.mxu0 0
        %1753 = vmatmul.mubr.bf16.gmra.mrb[0].mxu0 %v1658
        %v1754 = vpop.f32.mrb[0].mxu0
        %v1755 = vadd.f32 %v1634, %v1754
        %v1756 = vpop.f32.mrb[0].mxu0
        %v1757 = vpop.f32.mrb[0].mxu0
        %v1758 = vadd.f32 %v1634, %v1757
        %v1759 = vpop.f32.mrb[0].mxu0
        %1760 = vmatprep.mubr.bf16.mxu0 0
        %1761 = vmatmul.mubr.bf16.gmra.mrb[0].mxu0 %v1661
        %v1762 = vpop.f32.mrb[0].mxu0
        %v1763 = vadd.f32 %v1634, %v1762
        %v1764 = vpop.f32.mrb[0].mxu0
        %v1765 = vpop.f32.mrb[0].mxu0
        %v1766 = vadd.f32 %v1634, %v1765
        %v1767 = vpop.f32.mrb[0].mxu0
        %1768 = vmatprep.mubr.bf16.mxu0 0
        %1769 = vmatmul.mubr.bf16.gmra.mrb[0].mxu0 %v1664
        %v1770 = vpop.f32.mrb[0].mxu0
        %v1771 = vadd.f32 %v1634, %v1770
        %v1772 = vpop.f32.mrb[0].mxu0
        %v1773 = vpop.f32.mrb[0].mxu0
        %v1774 = vadd.f32 %v1634, %v1773
        %v1775 = vpop.f32.mrb[0].mxu0
        %1776 = vmatprep.mubr.bf16.mxu0 0
        %1777 = vmatmul.mubr.bf16.gmra.mrb[0].mxu0 %v1667
        %v1778 = vpop.f32.mrb[0].mxu0
        %v1779 = vadd.f32 %v1634, %v1778
        %v1780 = vpop.f32.mrb[0].mxu0
        %v1781 = vpop.f32.mrb[0].mxu0
        %v1782 = vadd.f32 %v1634, %v1781
        %v1783 = vpop.f32.mrb[0].mxu0
        %1784 = vmatprep.mubr.bf16.mxu0 0
        %1785 = vmatmul.mubr.bf16.gmra.mrb[0].mxu0 %v1670
        %v1786 = vpop.f32.mrb[0].mxu0
        %v1787 = vadd.f32 %v1634, %v1786
        %v1788 = vpop.f32.mrb[0].mxu0
        %v1789 = vpop.f32.mrb[0].mxu0
        %v1790 = vadd.f32 %v1634, %v1789
        %v1791 = vpop.f32.mrb[0].mxu0
        %1792 = vmatprep.mubr.bf16.mxu0 0
        %1793 = vmatmul.mubr.bf16.gmra.mrb[0].mxu0 %v1673
        %v1794 = vpop.f32.mrb[0].mxu0
        %v1795 = vadd.f32 %v1634, %v1794
        %v1796 = vpop.f32.mrb[0].mxu0
        %v1797 = vpop.f32.mrb[0].mxu0
        %v1798 = vadd.f32 %v1634, %v1797
        %v1799 = vpop.f32.mrb[0].mxu0
        %1800 = vmatprep.mubr.bf16.mxu0 0
        %1801 = vmatmul.mubr.bf16.gmra.mrb[0].mxu0 %v1676
        %v1802 = vpop.f32.mrb[0].mxu0
        %v1803 = vadd.f32 %v1634, %v1802
        %v1804 = vpop.f32.mrb[0].mxu0
        %v1805 = vpop.f32.mrb[0].mxu0
        %v1806 = vadd.f32 %v1634, %v1805
        %v1807 = vpop.f32.mrb[0].mxu0
        %1808 = vmatprep.mubr.bf16.mxu0 0
        %1809 = vmatmul.mubr.bf16.gmra.mrb[0].mxu0 %v1679
        %v1810 = vpop.f32.mrb[0].mxu0
        %v1811 = vadd.f32 %v1634, %v1810
        %v1812 = vpop.f32.mrb[0].mxu0
        %v1813 = vpop.f32.mrb[0].mxu0
        %v1814 = vadd.f32 %v1634, %v1813
        %v1815 = vpop.f32.mrb[0].mxu0
        %1816 = vmatprep.mubr.bf16.mxu0 0
        %1817 = vmatmul.mubr.bf16.gmra.mrb[0].mxu0 %v1682
        %v1818 = vpop.f32.mrb[0].mxu0
        %v1819 = vadd.f32 %v1634, %v1818
        %v1820 = vpop.f32.mrb[0].mxu0
        %v1821 = vpop.f32.mrb[0].mxu0
        %v1822 = vadd.f32 %v1634, %v1821
        %v1823 = vpop.f32.mrb[0].mxu0
        %1824 = vmatprep.mubr.bf16.mxu0 0
        %1825 = vmatmul.mubr.bf16.gmra.mrb[0].mxu0 %v1685
        %v1826 = vpop.f32.mrb[0].mxu0
        %v1827 = vadd.f32 %v1634, %v1826
        %v1828 = vpop.f32.mrb[0].mxu0
        %v1829 = vpop.f32.mrb[0].mxu0
        %v1830 = vadd.f32 %v1634, %v1829
        %v1831 = vpop.f32.mrb[0].mxu0
        %1832 = vmatprep.mubr.bf16.mxu0 0
        %1833 = vmatmul.mubr.bf16.gmra.mrb[0].mxu0 %v1688
        %v1834 = vpop.f32.mrb[0].mxu0
        %v1835 = vadd.f32 %v1634, %v1834
        %v1836 = vpop.f32.mrb[0].mxu0
        %v1837 = vpop.f32.mrb[0].mxu0
        %v1838 = vadd.f32 %v1634, %v1837
        %v1839 = vpop.f32.mrb[0].mxu0
        %1840 = vmatprep.mubr.bf16.mxu0 0
        %1841 = vmatmul.mubr.bf16.gmra.mrb[0].mxu0 %v1691
        %v1842 = vpop.f32.mrb[0].mxu0
        %v1843 = vadd.f32 %v1634, %v1842
        %v1844 = vpop.f32.mrb[0].mxu0
        %v1845 = vpop.f32.mrb[0].mxu0
        %v1846 = vadd.f32 %v1634, %v1845
        %v1847 = vpop.f32.mrb[0].mxu0
        %1848 = vmatprep.mubr.bf16.mxu0 0
        %1849 = vmatmul.mubr.bf16.gmra.mrb[0].mxu0 %v1694
        %v1850 = vpop.f32.mrb[0].mxu0
        %v1851 = vadd.f32 %v1634, %v1850
        %v1852 = vpop.f32.mrb[0].mxu0
        %v1853 = vpop.f32.mrb[0].mxu0
        %v1854 = vadd.f32 %v1634, %v1853
        %v1855 = vpop.f32.mrb[0].mxu0
        %1856 = vdwg.mxu0
        %v1857 = vld [vmem:[%s433] sm:$0x3]
        %v1858 = vlaneseq
        %v1859 = vshrl.u32 %v1858, 7
        %v1860 = vadd.s32 %v1859, 8
        %v1861 = vadd.s32 %v1859, 16
        %v1862 = vadd.s32 %v1859, 24
        %v1863 = vlaneseq
        %v1864 = vshrl.u32 %v1863, 7
        %v1865 = vsub.s32 0, %v1864
        %v1866 = vrot.slane %v1857, %v1865
        %v1867 = vlaneseq
        %v1868 = vshrl.u32 %v1867, 7
        %v1869 = vsub.s32 1, %v1868
        %v1870 = vrot.slane %v1857, %v1869
        %vm1871 = vcmp.eq.s32.totalorder %v1859, %v1866
        %vm1872 = vcmp.eq.s32.totalorder %v1859, %v1870
        %vm1873 = vcmp.eq.s32.totalorder %v1860, %v1866
        %vm1874 = vcmp.eq.s32.totalorder %v1860, %v1870
        %vm1875 = vcmp.eq.s32.totalorder %v1861, %v1866
        %vm1876 = vcmp.eq.s32.totalorder %v1861, %v1870
        %vm1877 = vcmp.eq.s32.totalorder %v1862, %v1866
        %vm1878 = vcmp.eq.s32.totalorder %v1862, %v1870
        %v1879 = vsel %vm1871, 1, 0
        %v1880 = vsel %vm1872, 1, 0
        %v1881 = vsel %vm1873, 1, 0
        %v1882 = vsel %vm1874, 1, 0
        %v1883 = vsel %vm1875, 1, 0
        %v1884 = vsel %vm1876, 1, 0
        %v1885 = vsel %vm1877, 1, 0
        %v1886 = vsel %vm1878, 1, 0
        %v1887 = vcvt.s32.f32 %v1879
        %v1888 = vcvt.s32.f32 %v1880
        %v1889 = vcvt.s32.f32 %v1881
        %v1890 = vcvt.s32.f32 %v1882
        %v1891 = vcvt.s32.f32 %v1883
        %v1892 = vcvt.s32.f32 %v1884
        %v1893 = vcvt.s32.f32 %v1885
        %v1894 = vcvt.s32.f32 %v1886
        %v1895 = vpack.c.bf16 %v1889, %v1887
        %v1896 = vpack.c.bf16 %v1890, %v1888
        %v1897 = vpack.c.bf16 %v1893, %v1891
        %v1898 = vpack.c.bf16 %v1894, %v1892
        %v1899 = vld [vmem:[%s416] sm:$0xff]
        %v1900 = vld [vmem:[%s416 + $0x8] sm:$0xff]
        %v1901 = vld [vmem:[%s416 + $0x10] sm:$0xff]
        %v1902 = vld [vmem:[%s416 + $0x18] sm:$0xff]
        %v1903 = vpack.c.bf16 %v1734, %v1731
        %v1904 = vpack.c.bf16 %v1742, %v1739
        %v1905 = vpack.c.bf16 %v1750, %v1747
        %v1906 = vpack.c.bf16 %v1758, %v1755
        %v1907 = vpack.c.bf16 %v1766, %v1763
        %v1908 = vpack.c.bf16 %v1774, %v1771
        %v1909 = vpack.c.bf16 %v1782, %v1779
        %v1910 = vpack.c.bf16 %v1790, %v1787
        %v1911 = vpack.c.bf16 %v1798, %v1795
        %v1912 = vpack.c.bf16 %v1806, %v1803
        %v1913 = vpack.c.bf16 %v1814, %v1811
        %v1914 = vpack.c.bf16 %v1822, %v1819
        %v1915 = vpack.c.bf16 %v1830, %v1827
        %v1916 = vpack.c.bf16 %v1838, %v1835
        %v1917 = vpack.c.bf16 %v1846, %v1843
        %v1918 = vpack.c.bf16 %v1854, %v1851
        %1919 = vmatprep.subr.bf16.mxu0 0
        %1920 = vmatpush1.bf16.msra.mxu0 %v1903
        %1921 = vmatprep.subr.bf16.mxu0 0
        %1922 = vmatpush1.bf16.msra.mxu0 %v1904
        %1923 = vmatprep.subr.bf16.mxu0 0
        %1924 = vmatpush1.bf16.msra.mxu0 %v1905
        %1925 = vmatprep.subr.bf16.mxu0 0
        %1926 = vmatpush1.bf16.msra.mxu0 %v1906
        %1927 = vmatprep.subr.bf16.mxu0 0
        %1928 = vmatpush1.bf16.msra.mxu0 %v1907
        %1929 = vmatprep.subr.bf16.mxu0 0
        %1930 = vmatpush1.bf16.msra.mxu0 %v1908
        %1931 = vmatprep.subr.bf16.mxu0 0
        %1932 = vmatpush1.bf16.msra.mxu0 %v1909
        %1933 = vmatprep.subr.bf16.mxu0 0
        %1934 = vmatpush1.bf16.msra.mxu0 %v1910
        %1935 = vmatprep.subr.bf16.mxu0 0
        %1936 = vmatpush1.bf16.msra.mxu0 %v1911
        %1937 = vmatprep.subr.bf16.mxu0 0
        %1938 = vmatpush1.bf16.msra.mxu0 %v1912
        %1939 = vmatprep.subr.bf16.mxu0 0
        %1940 = vmatpush1.bf16.msra.mxu0 %v1913
        %1941 = vmatprep.subr.bf16.mxu0 0
        %1942 = vmatpush1.bf16.msra.mxu0 %v1914
        %1943 = vmatprep.subr.bf16.mxu0 0
        %1944 = vmatpush1.bf16.msra.mxu0 %v1915
        %1945 = vmatprep.subr.bf16.mxu0 0
        %1946 = vmatpush1.bf16.msra.mxu0 %v1916
        %1947 = vmatprep.subr.bf16.mxu0 0
        %1948 = vmatpush1.bf16.msra.mxu0 %v1917
        %1949 = vmatprep.subr.bf16.mxu0 0
        %1950 = vmatpush1.bf16.msra.mxu0 %v1918
        %1951 = vmatprep.mubr.bf16.mxu0 %v1896
        %1952 = vmatmul.mubr.bf16.gmra.mrb[0].mxu0 %v1895
        %v1953 = vpop.f32.mrb[0].mxu0
        %v1954 = vadd.f32 0.0, %v1953
        %v1955 = vpop.f32.mrb[0].mxu0
        %v1956 = vpop.f32.mrb[0].mxu0
        %v1957 = vadd.f32 0.0, %v1956
        %v1958 = vpop.f32.mrb[0].mxu0
        %1959 = vmatprep.mubr.bf16.mxu0 %v1898
        %1960 = vmatmul.mubr.bf16.gmra.mrb[0].mxu0 %v1897
        %v1961 = vpop.f32.mrb[0].mxu0
        %v1962 = vadd.f32 0.0, %v1961
        %v1963 = vpop.f32.mrb[0].mxu0
        %v1964 = vpop.f32.mrb[0].mxu0
        %v1965 = vadd.f32 0.0, %v1964
        %v1966 = vpop.f32.mrb[0].mxu0
        %1967 = vdwg.mxu0
        %v1968 = vadd.f32 %v1899, %v1954
        %v1969 = vadd.f32 %v1900, %v1957
        %v1970 = vadd.f32 %v1901, %v1962
        %v1971 = vadd.f32 %v1902, %v1965
        %1972 = vst [vmem:[%s416] sm:$0xff] %v1968
        %1973 = vst [vmem:[%s416 + $0x8] sm:$0xff] %v1969
        %1974 = vst [vmem:[%s416 + $0x10] sm:$0xff] %v1970
        %1975 = vst [vmem:[%s416 + $0x18] sm:$0xff] %v1971
        %s1976 = sand.u32 %s262, 1
        %s1977 = scalar_lea.sflag [#allocation4], %s1976
        %s1978 = sand.u32 %s262, 1
        %s1979 = smul.addr %s1978, 32
        %s1980 = scalar_lea.vmem [#allocation5], %s1979
        // Predicated region
        $region65: #{tpu_custom_call.1} parent=55 // pred_check
          %p1981 = pneg %p272
        $region66: #{tpu_custom_call.1} parent=55 // pred_check_branch
          %1983 = sbr.rel (%p1981) target = $region68
        $region67: #{tpu_custom_call.1} parent=55 // pred_region
          %s1985 = ssub.s32 512, 512
          %1986 = vsyncadd %s1977, %s1985
          %s1987 = smul.addr %s30, 4
          %s1988 = smul.addr %s1987, 128
          %s1989 = scalar_lea.hbm %s9, %s1988
          %s1990 = sshll.u32 %s1980, 4
          %s1991 = int_to_ptr.vmem [resolvable:$true] %s1990
          %1996 = dma.vmem_to_hbm [thread:$0]  %s1991, 512, %s1989, %s1977, 128, 128, 8
        $region68: #{tpu_custom_call.1} parent=55 // pred_fallthru
          _
      $region56: #{tpu_custom_call.1} parent=5 // pred_fallthru
        _
      %p1997 = scmp.le.s32.totalorder 2, %s21
      // Predicated region
      $region69: #{tpu_custom_call.1} parent=5 // pred_check
        %p1998 = pneg %p1997
      $region70: #{tpu_custom_call.1} parent=5 // pred_check_branch
        %2000 = sbr.rel (%p1998) target = $region72
      $region71: #{tpu_custom_call.1} parent=5 // pred_region
        %s2001 = ssub.s32 %s21, 2
        // Predicated region
        $region73: #{tpu_custom_call.1} parent=71 // pred_check
          %p2002 = pneg %p278
        $region74: #{tpu_custom_call.1} parent=71 // pred_check_branch
          %2004 = sbr.rel (%p2002) target = $region76
        $region75: #{tpu_custom_call.1} parent=71 // pred_region
          %s2005 = sand.u32 %s263, 1
          %s2006 = scalar_lea.sflag [#allocation4], %s2005
          %s2007 = sand.u32 %s263, 1
          %s2008 = smul.addr %s2007, 32
          %s2009 = scalar_lea.vmem [#allocation5], %s2008
          %2010 = dma.done %s2006, 512
        $region76: #{tpu_custom_call.1} parent=71 // pred_fallthru
          _
      $region72: #{tpu_custom_call.1} parent=5 // pred_fallthru
        _
    $region6: #{tpu_custom_call.1} parent=1 // loop_footer
      %s25 = sadd.s32 1, %s21
    $region7: #{tpu_custom_call.1} parent=1 // loop_footer_branch
      %20 = sbr.rel target = $region3
    $region8: #{tpu_custom_call.1} parent=1 // loop_exit
      _
    %2011 = vsyncpa [#allocation3], 1
    %s2012 = scalar_lea.sflag [#allocation3], 1
    %2013 = vsyncpa %s2012, 1
    %2014 = vsyncpa [#allocation4], 1
    %s2015 = scalar_lea.sflag [#allocation4], 1
    %2016 = vsyncpa %s2015, 1

</llo_original>
